<compile_context>
chip_gen: v5e
topology: v5e:2x2
jax: 0.10.0
libtpu: 0.0.40
codegen_flags: <defaults>
</compile_context>

<pallas_src>
import jax
import jax.numpy as jnp
from jax.experimental import pallas as pl
from jax.experimental.pallas import tpu as pltpu


def _rdb_conv_block_kernel(xb_ref, x_ref, w_ref, b_ref, o_ref):
    """One R-row block: 3x3 conv (9 accumulating MXU dots) + bias + ReLU + concat.

    xb_ref : (1, 1, R+2, W+2, Cin) bf16  zero-padded halo'd input rows
    x_ref  : (1, R,   W,   Cin)    f32   unpadded rows (exact passthrough)
    w_ref  : (9, Cin, G)           bf16  HWIO weight, tap index = 3*dy + dx
    b_ref  : (1, G)                f32   bias
    o_ref  : (1, R,   W, Cin+G)    f32   output block = [x | relu(conv)]
    """
    R = o_ref.shape[1]
    W = o_ref.shape[2]
    Cin = x_ref.shape[3]
    G = w_ref.shape[2]

    # 3x3 conv as 9 accumulating bf16 matmuls with a single f32 accumulator.
    # This avoids the lane-dim im2col concat and the f32 patch round trip.
    # TODO(synk): for production Cin >= 64, compare against one deep-K
    # (R*W, 9*Cin) bf16 im2col matmul — shallower K here trades MXU cadence
    # for zero relayout/concat work; pick per bundle measurement.
    acc = jnp.zeros((R * W, G), jnp.float32)
    for dy in range(3):
        for dx in range(3):
            patch = xb_ref[0, 0, pl.ds(dy, R), pl.ds(dx, W), :]      # (R, W, Cin) bf16
            acc = acc + jnp.dot(patch.reshape(R * W, Cin),
                                w_ref[3 * dy + dx],
                                preferred_element_type=jnp.float32)

    y = jnp.maximum(acc + b_ref[...].astype(jnp.float32), 0.0)       # (R*W, G) f32
    y = y.reshape(R, W, G)

    # Fused torch.cat((x, out), dim=channel): build the (R, W, Cin+G) tile in
    # registers and store it once.  Passthrough channels stay exact f32.
    # TODO(synk): Cin+G below / not a multiple of 128 still means masked
    # vst.msk stores; pad channel counts (or flatten W*(Cin+G) onto the lane
    # dim) across a full RDB chain for a lane-dense store path.
    tile = jnp.concatenate([x_ref[0].astype(jnp.float32), y], axis=-1)
    o_ref[0] = tile.astype(o_ref.dtype)


def _pick_row_block(H, W, Cin, G, max_rows=32,
                    vmem_budget_bytes=16 * 1024 * 1024):
    """Largest R that divides H, is <= max_rows, and whose double-buffered
    per-step footprint fits a conservative budget (safe on v7x's 64 MiB VMEM,
    leaves headroom on v5e/v6e's 128 MiB)."""
    def step_bytes(r):
        halo_in = (r + 2) * (W + 2) * Cin * 2        # bf16 halo block
        pass_in = r * W * Cin * 4                    # f32 passthrough block
        out_blk = r * W * (Cin + G) * 4              # f32 output block
        return 2 * (halo_in + pass_in + out_blk)     # x2 double buffering
    cands = [r for r in range(1, H + 1)
             if H % r == 0 and r <= max_rows
             and step_bytes(r) <= vmem_budget_bytes]
    if not cands:
        return 1
    # Prefer >= 2 row blocks so both v7x TensorCores get work even when B == 1.
    multi = [r for r in cands if H // r >= 2]
    return max(multi) if multi else max(cands)


def rdb_conv_forward_nhwc(x_nhwc, weight, bias):
    """NHWC RDB_Conv: concat([x, relu(conv3x3(x))], channel axis).

    x_nhwc : (B, H, W, Cin) f32
    weight : (3, 3, Cin, G) f32 (HWIO)
    bias   : (G,)           f32
    returns: (B, H, W, Cin + G) f32
    """
    B, H, W, Cin = x_nhwc.shape
    G = weight.shape[-1]
    R = _pick_row_block(H, W, Cin, G)
    Hb = H // R

    # Zero-pad and pre-gather (R+2)-row halo blocks so each activation row is
    # DMA'd into VMEM exactly once per grid step (no triple-fetch of rows).
    # TODO(synk): fold the pad + halo gather into the kernel with manual DMA
    # (memory_space=pl.ANY + make_async_copy) to drop this extra XLA pass.
    xp = jnp.pad(x_nhwc.astype(jnp.bfloat16), ((0, 0), (1, 1), (1, 1), (0, 0)))
    row_idx = jnp.arange(Hb)[:, None] * R + jnp.arange(R + 2)[None, :]
    xb = xp[:, row_idx]                               # (B, Hb, R+2, W+2, Cin) bf16

    w3d = weight.reshape(9, Cin, G).astype(jnp.bfloat16)   # tap index = 3*dy+dx
    b2d = bias.reshape(1, G).astype(jnp.float32)

    out_nhwc = pl.pallas_call(
        _rdb_conv_block_kernel,
        out_shape=jax.ShapeDtypeStruct((B, H, W, Cin + G), x_nhwc.dtype),
        grid_spec=pltpu.PrefetchScalarGridSpec(
            num_scalar_prefetch=0,
            grid=(B, Hb),
            in_specs=[
                pl.BlockSpec((1, 1, R + 2, W + 2, Cin),
                             lambda b, j: (b, j, 0, 0, 0)),
                pl.BlockSpec((1, R, W, Cin), lambda b, j: (b, j, 0, 0)),
                # Constant block indices: weight/bias stay VMEM-resident
                # across all B * Hb grid steps (no per-step re-DMA).
                pl.BlockSpec((9, Cin, G), lambda b, j: (0, 0, 0)),
                pl.BlockSpec((1, G), lambda b, j: (0, 0)),
            ],
            out_specs=pl.BlockSpec((1, R, W, Cin + G), lambda b, j: (b, j, 0, 0)),
        ),
        compiler_params=pltpu.CompilerParams(
            dimension_semantics=("parallel", "parallel"),
            # Above the 32 MiB scoped default (v5e/v6e feedback) while leaving
            # headroom under v7x's 64 MiB physical VMEM per TensorCore.
            vmem_limit_bytes=48 * 1024 * 1024,
        ),
    )(xb, x_nhwc, w3d, b2d)
    # TODO(synk): chain-level — emit only the (B, H, W, G) conv result (bf16)
    # and let the next RDB_Conv read [x, y1, ...] through separate in_specs
    # instead of rematerializing the growing f32 concat every unit.
    return out_nhwc


def rdb_conv_forward(x_nchw, weight, bias):
    """NCHW wrapper matching the PyTorch module interface."""
    # TODO(synk): inside a full RDN/RDB chain keep activations NHWC end-to-end
    # and call rdb_conv_forward_nhwc directly; these transposes are per-call
    # boundary glue only.
    x_nhwc = jnp.transpose(x_nchw, (0, 2, 3, 1))
    out_nhwc = rdb_conv_forward_nhwc(x_nhwc, weight, bias)
    return jnp.transpose(out_nhwc, (0, 3, 1, 2))


def _reference(x_nchw, weight, bias):
    # Pure-JAX reference: conv + relu + concat (NCHW, HWIO weights), f32.
    y = jax.lax.conv_general_dilated(
        x_nchw, weight,
        window_strides=(1, 1), padding="SAME",
        dimension_numbers=("NCHW", "HWIO", "NCHW"))
    y = jnp.maximum(y + bias[None, :, None, None], 0.0)
    return jnp.concatenate([x_nchw, y], axis=1)


if __name__ == "__main__":
    B, Cin, G, H, W = 2, 4, 8, 16, 16

    key = jax.random.PRNGKey(0)
    kx, kw, kb = jax.random.split(key, 3)
    x = jax.random.normal(kx, (B, Cin, H, W), dtype=jnp.float32)
    # Conv2d(Cin, G, 3) params in HWIO layout (3, 3, Cin, G).
    weight = jax.random.normal(kw, (3, 3, Cin, G), dtype=jnp.float32) * 0.1
    bias = jax.random.normal(kb, (G,), dtype=jnp.float32) * 0.1

    out = jax.jit(rdb_conv_forward)(x, weight, bias)
    out = jax.block_until_ready(out)

    ref = _reference(x, weight, bias)
    assert out.shape == (B, Cin + G, H, W)
    # Passthrough channels are copied in f32 and must match exactly.
    assert jnp.allclose(out[:, :Cin], x, atol=1e-6, rtol=0.0)
    # Conv channels use bf16 MXU inputs with f32 accumulation -> relaxed tol.
    assert jnp.allclose(out[:, Cin:], ref[:, Cin:], atol=5e-2, rtol=5e-2)

    print("KERNEL_OK")
</pallas_src>

<mosaic_0001>
module attributes {stable_mosaic.version = 11 : i64} {
  func.func @_rdb_conv_block_kernel(%arg0: i32, %arg1: i32, %arg2: memref<1x1x10x18x4xbf16, #tpu.memory_space<vmem>>, %arg3: memref<1x8x16x4xf32, #tpu.memory_space<vmem>>, %arg4: memref<9x4x8xbf16, #tpu.memory_space<vmem>>, %arg5: memref<1x8xf32, #tpu.memory_space<vmem>>, %arg6: memref<1x8x16x12xf32, #tpu.memory_space<vmem>>) attributes {dimension_semantics = [#tpu.dimension_semantics<parallel>, #tpu.dimension_semantics<parallel>], iteration_bounds = array<i64: 2, 2>, scalar_prefetch = 0 : i64, scratch_operands = 0 : i64, tpu.core_type = #tpu.core_type<tc>, window_params = [{transform_indices = @transform_0, window_bounds = array<i64: 1, 1, 10, 18, 4>}, {transform_indices = @transform_1, window_bounds = array<i64: 1, 8, 16, 4>}, {pipeline_mode = #tpu.pipeline_mode<synchronous>, transform_indices = @transform_2, window_bounds = array<i64: 9, 4, 8>}, {pipeline_mode = #tpu.pipeline_mode<synchronous>, transform_indices = @transform_3, window_bounds = array<i64: 1, 8>}, {transform_indices = @transform_4, window_bounds = array<i64: 1, 8, 16, 12>}]} {
    %cst = arith.constant 0.000000e+00 : f32
    %0 = vector.broadcast %cst : f32 to vector<128x8xf32>
    %c0 = arith.constant 0 : index
    %c0_0 = arith.constant 0 : index
    %c0_1 = arith.constant 0 : index
    %c0_2 = arith.constant 0 : index
    %c0_3 = arith.constant 0 : index
    %1 = vector.load %arg2[%c0, %c0_0, %c0_1, %c0_2, %c0_3] : memref<1x1x10x18x4xbf16, #tpu.memory_space<vmem>>, vector<1x1x8x16x4xbf16>
    %2 = vector.shape_cast %1 : vector<1x1x8x16x4xbf16> to vector<8x16x4xbf16>
    %3 = vector.shape_cast %2 : vector<8x16x4xbf16> to vector<128x4xbf16>
    %c0_4 = arith.constant 0 : index
    %c0_5 = arith.constant 0 : index
    %c0_6 = arith.constant 0 : index
    %4 = vector.load %arg4[%c0_4, %c0_5, %c0_6] : memref<9x4x8xbf16, #tpu.memory_space<vmem>>, vector<1x4x8xbf16>
    %5 = vector.shape_cast %4 : vector<1x4x8xbf16> to vector<4x8xbf16>
    %cst_7 = arith.constant dense<0.000000e+00> : vector<128x8xf32>
    %6 = tpu.matmul %3, %5, %cst_7 {dimension_numbers = #tpu.dot_dimension_numbers<[1], [0], [0], [1], [0, 0, 1, 1], [], []>} : vector<128x4xbf16>, vector<4x8xbf16>, vector<128x8xf32> -> vector<128x8xf32>
    %7 = arith.addf %0, %6 : vector<128x8xf32>
    %c0_8 = arith.constant 0 : index
    %c0_9 = arith.constant 0 : index
    %c0_10 = arith.constant 0 : index
    %c1 = arith.constant 1 : index
    %c0_11 = arith.constant 0 : index
    %8 = vector.load %arg2[%c0_8, %c0_9, %c0_10, %c1, %c0_11] : memref<1x1x10x18x4xbf16, #tpu.memory_space<vmem>>, vector<1x1x8x16x4xbf16>
    %9 = vector.shape_cast %8 : vector<1x1x8x16x4xbf16> to vector<8x16x4xbf16>
    %10 = vector.shape_cast %9 : vector<8x16x4xbf16> to vector<128x4xbf16>
    %c1_12 = arith.constant 1 : index
    %c0_13 = arith.constant 0 : index
    %c0_14 = arith.constant 0 : index
    %11 = vector.load %arg4[%c1_12, %c0_13, %c0_14] : memref<9x4x8xbf16, #tpu.memory_space<vmem>>, vector<1x4x8xbf16>
    %12 = vector.shape_cast %11 : vector<1x4x8xbf16> to vector<4x8xbf16>
    %cst_15 = arith.constant dense<0.000000e+00> : vector<128x8xf32>
    %13 = tpu.matmul %10, %12, %cst_15 {dimension_numbers = #tpu.dot_dimension_numbers<[1], [0], [0], [1], [0, 0, 1, 1], [], []>} : vector<128x4xbf16>, vector<4x8xbf16>, vector<128x8xf32> -> vector<128x8xf32>
    %14 = arith.addf %7, %13 : vector<128x8xf32>
    %c0_16 = arith.constant 0 : index
    %c0_17 = arith.constant 0 : index
    %c0_18 = arith.constant 0 : index
    %c2 = arith.constant 2 : index
    %c0_19 = arith.constant 0 : index
    %15 = vector.load %arg2[%c0_16, %c0_17, %c0_18, %c2, %c0_19] : memref<1x1x10x18x4xbf16, #tpu.memory_space<vmem>>, vector<1x1x8x16x4xbf16>
    %16 = vector.shape_cast %15 : vector<1x1x8x16x4xbf16> to vector<8x16x4xbf16>
    %17 = vector.shape_cast %16 : vector<8x16x4xbf16> to vector<128x4xbf16>
    %c2_20 = arith.constant 2 : index
    %c0_21 = arith.constant 0 : index
    %c0_22 = arith.constant 0 : index
    %18 = vector.load %arg4[%c2_20, %c0_21, %c0_22] : memref<9x4x8xbf16, #tpu.memory_space<vmem>>, vector<1x4x8xbf16>
    %19 = vector.shape_cast %18 : vector<1x4x8xbf16> to vector<4x8xbf16>
    %cst_23 = arith.constant dense<0.000000e+00> : vector<128x8xf32>
    %20 = tpu.matmul %17, %19, %cst_23 {dimension_numbers = #tpu.dot_dimension_numbers<[1], [0], [0], [1], [0, 0, 1, 1], [], []>} : vector<128x4xbf16>, vector<4x8xbf16>, vector<128x8xf32> -> vector<128x8xf32>
    %21 = arith.addf %14, %20 : vector<128x8xf32>
    %c0_24 = arith.constant 0 : index
    %c0_25 = arith.constant 0 : index
    %c1_26 = arith.constant 1 : index
    %c0_27 = arith.constant 0 : index
    %c0_28 = arith.constant 0 : index
    %22 = vector.load %arg2[%c0_24, %c0_25, %c1_26, %c0_27, %c0_28] : memref<1x1x10x18x4xbf16, #tpu.memory_space<vmem>>, vector<1x1x8x16x4xbf16>
    %23 = vector.shape_cast %22 : vector<1x1x8x16x4xbf16> to vector<8x16x4xbf16>
    %24 = vector.shape_cast %23 : vector<8x16x4xbf16> to vector<128x4xbf16>
    %c3 = arith.constant 3 : index
    %c0_29 = arith.constant 0 : index
    %c0_30 = arith.constant 0 : index
    %25 = vector.load %arg4[%c3, %c0_29, %c0_30] : memref<9x4x8xbf16, #tpu.memory_space<vmem>>, vector<1x4x8xbf16>
    %26 = vector.shape_cast %25 : vector<1x4x8xbf16> to vector<4x8xbf16>
    %cst_31 = arith.constant dense<0.000000e+00> : vector<128x8xf32>
    %27 = tpu.matmul %24, %26, %cst_31 {dimension_numbers = #tpu.dot_dimension_numbers<[1], [0], [0], [1], [0, 0, 1, 1], [], []>} : vector<128x4xbf16>, vector<4x8xbf16>, vector<128x8xf32> -> vector<128x8xf32>
    %28 = arith.addf %21, %27 : vector<128x8xf32>
    %c0_32 = arith.constant 0 : index
    %c0_33 = arith.constant 0 : index
    %c1_34 = arith.constant 1 : index
    %c1_35 = arith.constant 1 : index
    %c0_36 = arith.constant 0 : index
    %29 = vector.load %arg2[%c0_32, %c0_33, %c1_34, %c1_35, %c0_36] : memref<1x1x10x18x4xbf16, #tpu.memory_space<vmem>>, vector<1x1x8x16x4xbf16>
    %30 = vector.shape_cast %29 : vector<1x1x8x16x4xbf16> to vector<8x16x4xbf16>
    %31 = vector.shape_cast %30 : vector<8x16x4xbf16> to vector<128x4xbf16>
    %c4 = arith.constant 4 : index
    %c0_37 = arith.constant 0 : index
    %c0_38 = arith.constant 0 : index
    %32 = vector.load %arg4[%c4, %c0_37, %c0_38] : memref<9x4x8xbf16, #tpu.memory_space<vmem>>, vector<1x4x8xbf16>
    %33 = vector.shape_cast %32 : vector<1x4x8xbf16> to vector<4x8xbf16>
    %cst_39 = arith.constant dense<0.000000e+00> : vector<128x8xf32>
    %34 = tpu.matmul %31, %33, %cst_39 {dimension_numbers = #tpu.dot_dimension_numbers<[1], [0], [0], [1], [0, 0, 1, 1], [], []>} : vector<128x4xbf16>, vector<4x8xbf16>, vector<128x8xf32> -> vector<128x8xf32>
    %35 = arith.addf %28, %34 : vector<128x8xf32>
    %c0_40 = arith.constant 0 : index
    %c0_41 = arith.constant 0 : index
    %c1_42 = arith.constant 1 : index
    %c2_43 = arith.constant 2 : index
    %c0_44 = arith.constant 0 : index
    %36 = vector.load %arg2[%c0_40, %c0_41, %c1_42, %c2_43, %c0_44] : memref<1x1x10x18x4xbf16, #tpu.memory_space<vmem>>, vector<1x1x8x16x4xbf16>
    %37 = vector.shape_cast %36 : vector<1x1x8x16x4xbf16> to vector<8x16x4xbf16>
    %38 = vector.shape_cast %37 : vector<8x16x4xbf16> to vector<128x4xbf16>
    %c5 = arith.constant 5 : index
    %c0_45 = arith.constant 0 : index
    %c0_46 = arith.constant 0 : index
    %39 = vector.load %arg4[%c5, %c0_45, %c0_46] : memref<9x4x8xbf16, #tpu.memory_space<vmem>>, vector<1x4x8xbf16>
    %40 = vector.shape_cast %39 : vector<1x4x8xbf16> to vector<4x8xbf16>
    %cst_47 = arith.constant dense<0.000000e+00> : vector<128x8xf32>
    %41 = tpu.matmul %38, %40, %cst_47 {dimension_numbers = #tpu.dot_dimension_numbers<[1], [0], [0], [1], [0, 0, 1, 1], [], []>} : vector<128x4xbf16>, vector<4x8xbf16>, vector<128x8xf32> -> vector<128x8xf32>
    %42 = arith.addf %35, %41 : vector<128x8xf32>
    %c0_48 = arith.constant 0 : index
    %c0_49 = arith.constant 0 : index
    %c2_50 = arith.constant 2 : index
    %c0_51 = arith.constant 0 : index
    %c0_52 = arith.constant 0 : index
    %43 = vector.load %arg2[%c0_48, %c0_49, %c2_50, %c0_51, %c0_52] : memref<1x1x10x18x4xbf16, #tpu.memory_space<vmem>>, vector<1x1x8x16x4xbf16>
    %44 = vector.shape_cast %43 : vector<1x1x8x16x4xbf16> to vector<8x16x4xbf16>
    %45 = vector.shape_cast %44 : vector<8x16x4xbf16> to vector<128x4xbf16>
    %c6 = arith.constant 6 : index
    %c0_53 = arith.constant 0 : index
    %c0_54 = arith.constant 0 : index
    %46 = vector.load %arg4[%c6, %c0_53, %c0_54] : memref<9x4x8xbf16, #tpu.memory_space<vmem>>, vector<1x4x8xbf16>
    %47 = vector.shape_cast %46 : vector<1x4x8xbf16> to vector<4x8xbf16>
    %cst_55 = arith.constant dense<0.000000e+00> : vector<128x8xf32>
    %48 = tpu.matmul %45, %47, %cst_55 {dimension_numbers = #tpu.dot_dimension_numbers<[1], [0], [0], [1], [0, 0, 1, 1], [], []>} : vector<128x4xbf16>, vector<4x8xbf16>, vector<128x8xf32> -> vector<128x8xf32>
    %49 = arith.addf %42, %48 : vector<128x8xf32>
    %c0_56 = arith.constant 0 : index
    %c0_57 = arith.constant 0 : index
    %c2_58 = arith.constant 2 : index
    %c1_59 = arith.constant 1 : index
    %c0_60 = arith.constant 0 : index
    %50 = vector.load %arg2[%c0_56, %c0_57, %c2_58, %c1_59, %c0_60] : memref<1x1x10x18x4xbf16, #tpu.memory_space<vmem>>, vector<1x1x8x16x4xbf16>
    %51 = vector.shape_cast %50 : vector<1x1x8x16x4xbf16> to vector<8x16x4xbf16>
    %52 = vector.shape_cast %51 : vector<8x16x4xbf16> to vector<128x4xbf16>
    %c7 = arith.constant 7 : index
    %c0_61 = arith.constant 0 : index
    %c0_62 = arith.constant 0 : index
    %53 = vector.load %arg4[%c7, %c0_61, %c0_62] : memref<9x4x8xbf16, #tpu.memory_space<vmem>>, vector<1x4x8xbf16>
    %54 = vector.shape_cast %53 : vector<1x4x8xbf16> to vector<4x8xbf16>
    %cst_63 = arith.constant dense<0.000000e+00> : vector<128x8xf32>
    %55 = tpu.matmul %52, %54, %cst_63 {dimension_numbers = #tpu.dot_dimension_numbers<[1], [0], [0], [1], [0, 0, 1, 1], [], []>} : vector<128x4xbf16>, vector<4x8xbf16>, vector<128x8xf32> -> vector<128x8xf32>
    %56 = arith.addf %49, %55 : vector<128x8xf32>
    %c0_64 = arith.constant 0 : index
    %c0_65 = arith.constant 0 : index
    %c2_66 = arith.constant 2 : index
    %c2_67 = arith.constant 2 : index
    %c0_68 = arith.constant 0 : index
    %57 = vector.load %arg2[%c0_64, %c0_65, %c2_66, %c2_67, %c0_68] : memref<1x1x10x18x4xbf16, #tpu.memory_space<vmem>>, vector<1x1x8x16x4xbf16>
    %58 = vector.shape_cast %57 : vector<1x1x8x16x4xbf16> to vector<8x16x4xbf16>
    %59 = vector.shape_cast %58 : vector<8x16x4xbf16> to vector<128x4xbf16>
    %c8 = arith.constant 8 : index
    %c0_69 = arith.constant 0 : index
    %c0_70 = arith.constant 0 : index
    %60 = vector.load %arg4[%c8, %c0_69, %c0_70] : memref<9x4x8xbf16, #tpu.memory_space<vmem>>, vector<1x4x8xbf16>
    %61 = vector.shape_cast %60 : vector<1x4x8xbf16> to vector<4x8xbf16>
    %cst_71 = arith.constant dense<0.000000e+00> : vector<128x8xf32>
    %62 = tpu.matmul %59, %61, %cst_71 {dimension_numbers = #tpu.dot_dimension_numbers<[1], [0], [0], [1], [0, 0, 1, 1], [], []>} : vector<128x4xbf16>, vector<4x8xbf16>, vector<128x8xf32> -> vector<128x8xf32>
    %63 = arith.addf %56, %62 : vector<128x8xf32>
    %c0_72 = arith.constant 0 : index
    %c0_73 = arith.constant 0 : index
    %64 = vector.load %arg5[%c0_72, %c0_73] : memref<1x8xf32, #tpu.memory_space<vmem>>, vector<1x8xf32>
    %65 = vector.broadcast %64 : vector<1x8xf32> to vector<128x8xf32>
    %66 = arith.addf %63, %65 : vector<128x8xf32>
    %cst_74 = arith.constant 0.000000e+00 : f32
    %67 = vector.broadcast %cst_74 : f32 to vector<128x8xf32>
    %68 = arith.maximumf %66, %67 : vector<128x8xf32>
    %69 = vector.shape_cast %68 : vector<128x8xf32> to vector<8x16x8xf32>
    %c0_75 = arith.constant 0 : index
    %c0_76 = arith.constant 0 : index
    %c0_77 = arith.constant 0 : index
    %c0_78 = arith.constant 0 : index
    %70 = vector.load %arg3[%c0_75, %c0_76, %c0_77, %c0_78] : memref<1x8x16x4xf32, #tpu.memory_space<vmem>>, vector<1x8x16x4xf32>
    %71 = vector.shape_cast %70 : vector<1x8x16x4xf32> to vector<8x16x4xf32>
    %72 = tpu.concatenate %71, %69 in 2 : vector<8x16x4xf32>, vector<8x16x8xf32> -> vector<8x16x12xf32>
    %c0_79 = arith.constant 0 : index
    %c0_80 = arith.constant 0 : index
    %c0_81 = arith.constant 0 : index
    %c0_82 = arith.constant 0 : index
    %73 = vector.load %arg6[%c0_79, %c0_80, %c0_81, %c0_82] : memref<1x8x16x12xf32, #tpu.memory_space<vmem>>, vector<1x8x16x12xf32>
    %74 = vector.shape_cast %73 : vector<1x8x16x12xf32> to vector<8x16x12xf32>
    %75 = vector.shape_cast %72 : vector<8x16x12xf32> to vector<1x8x16x12xf32>
    tpu.vector_store %arg6[%c0_79, %c0_80, %c0_81, %c0_82], %75 {strides = array<i32>} : memref<1x8x16x12xf32, #tpu.memory_space<vmem>>, vector<1x8x16x12xf32>,
    return
  }
  func.func @transform_0(%arg0: i32, %arg1: i32) -> (i32, i32, i32, i32, i32) {
    %c0_i32 = arith.constant 0 : i32
    %c0_i32_0 = arith.constant 0 : i32
    %c0_i32_1 = arith.constant 0 : i32
    %c0_i32_2 = arith.constant 0 : i32
    return %arg0, %arg1, %c0_i32, %c0_i32_0, %c0_i32_1 : i32, i32, i32, i32, i32
  }
  func.func @transform_1(%arg0: i32, %arg1: i32) -> (i32, i32, i32, i32) {
    %c0_i32 = arith.constant 0 : i32
    %c0_i32_0 = arith.constant 0 : i32
    %c0_i32_1 = arith.constant 0 : i32
    return %arg0, %arg1, %c0_i32, %c0_i32_0 : i32, i32, i32, i32
  }
  func.func @transform_2(%arg0: i32, %arg1: i32) -> (i32, i32, i32) {
    %c0_i32 = arith.constant 0 : i32
    %c0_i32_0 = arith.constant 0 : i32
    %c0_i32_1 = arith.constant 0 : i32
    %c0_i32_2 = arith.constant 0 : i32
    return %c0_i32, %c0_i32_0, %c0_i32_1 : i32, i32, i32
  }
  func.func @transform_3(%arg0: i32, %arg1: i32) -> (i32, i32) {
    %c0_i32 = arith.constant 0 : i32
    %c0_i32_0 = arith.constant 0 : i32
    %c0_i32_1 = arith.constant 0 : i32
    return %c0_i32, %c0_i32_0 : i32, i32
  }
  func.func @transform_4(%arg0: i32, %arg1: i32) -> (i32, i32, i32, i32) {
    %c0_i32 = arith.constant 0 : i32
    %c0_i32_0 = arith.constant 0 : i32
    %c0_i32_1 = arith.constant 0 : i32
    return %arg0, %arg1, %c0_i32, %c0_i32_0 : i32, i32, i32, i32
  }
}

</mosaic_0001>

<llo_original>
// kernel: rdb_conv_forward.1
$region0: #{rdb_conv_forward.1}
  #allocation0 [shape = 'u32[]', space=smem, size = 0x4, offset = 0x4, fixed_abs, tag = 'smem constant byte address 0x4 - core index']
  #allocation1 [shape = 'u32[72,128]{1,0:T(1,128)}', space=vmem, size = 0x9000, scoped, tag = 'internal scratch']
  %s0 = inlined_call_operand.vmem [shape: bf16[2,2,10,18,4], index: 0, kind: input, shape index: {}]
  %s1 = inlined_call_operand.vmem [shape: f32[2,16,16,4], index: 1, kind: input, shape index: {}]
  %s2 = inlined_call_operand.vmem [shape: bf16[9,4,8], index: 2, kind: input, shape index: {}]
  %s3 = inlined_call_operand.vmem [shape: f32[1,8], index: 3, kind: input, shape index: {}]
  %s4 = inlined_call_operand.vmem [shape: f32[2,16,16,12], index: 4, kind: output, shape index: {}]
  %s5 = sld [smem:[#allocation0]]
  $region49: #{rdb_conv_forward.1} parent=0
    _
  %s7 = ssub.s32 1, %s5
  %s8 = scalar_select 0, %s7, %s5
  loop: start=0, step=1, limit=6
  $region2: #{rdb_conv_forward.1} parent=0 // loop_pre_header
    _
  $region3: #{rdb_conv_forward.1} parent=0 // loop_header
    %s10 = sphi 0, %s14
    %p11 = scmp.ge.s32.totalorder %s10, 6
    %s17 = sphi 0, %s29
    %s18 = sphi 0, %s25
    %s19 = sphi 0, %s17
    %s20 = sphi 0, %s18
    %s21 = sphi 0, %s19
    %s22 = sphi 0, %s20
    %s34 = sphi 0, %s36
    %s37 = sphi 0, %s34
    %s38 = sphi 0, %s37
    %s54 = sphi 0, %s38
    %s62 = sphi 0, %s64
    %s65 = sphi 0, %s62
    %s66 = sphi 0, %s65
    %s82 = sphi 0, %s66
    %s86 = sphi 0, %s86
    %s88 = sphi 0, %s86
    %s89 = sphi 0, %s88
    %s103 = sphi 0, %s89
    %s107 = sphi 0, %s107
    %s109 = sphi 0, %s107
    %s110 = sphi 0, %s109
    %s124 = sphi 0, %s110
    %s132 = sphi 0, %s134
    %s135 = sphi 0, %s132
    %s136 = sphi 0, %s135
    %s152 = sphi 0, %s136
  $region4: #{rdb_conv_forward.1} parent=0 // loop_header_branch
    %13 = sbr.rel (%p11) target = $region8
  $region5: #{rdb_conv_forward.1} parent=0 // loop_body
    %s15 = ssub.s32 %s10, 1
    %s16 = ssub.s32 %s10, 2
    %s23 = sadd.s32 1, %s18
    %p24 = scmp.ge.s32.totalorder %s23, 2
    %s25 = scalar_select %p24, 0, %s23
    %s26 = sadd.s32 1, %s17
    %s27 = scalar_select %p24, %s26, %s17
    %p28 = scmp.ge.s32.totalorder %s27, 2
    %s29 = scalar_select %p28, 0, %s27
    %s30 = ssub.s32 %s17, %s29
    %s31 = ssub.s32 %s18, %s25
    %s32 = sor.u32 %s30, %s31
    %p33 = scmp.eq.s32.totalorder %s32, 0
    %s35 = sadd.s32 %s34, 1
    %s36 = scalar_select %p33, %s34, %s35
    %p39 = pneg %p33
    %p40 = scmp.eq.s32.totalorder %s10, 3
    %p41 = por %p39, %p40
    %p42 = scmp.ne.s32.totalorder %s34, %s37
    %p43 = scmp.eq.s32.totalorder %s10, 0
    %p44 = por %p42, %p43
    %p45 = scmp.ne.s32.totalorder %s34, %s37
    %p46 = scmp.eq.s32.totalorder %s15, 3
    %p47 = por %p45, %p46
    %p48 = scmp.ne.s32.totalorder %s37, %s38
    %p49 = scmp.eq.s32.totalorder %s15, 0
    %p50 = por %p48, %p49
    %p51 = scmp.ne.s32.totalorder %s37, %s38
    %p52 = scmp.eq.s32.totalorder %s16, 3
    %p53 = por %p51, %p52
    %p55 = scmp.ne.s32.totalorder %s38, %s54
    %p56 = scmp.eq.s32.totalorder %s16, 0
    %p57 = por %p55, %p56
    %s58 = ssub.s32 %s17, %s29
    %s59 = ssub.s32 %s18, %s25
    %s60 = sor.u32 %s58, %s59
    %p61 = scmp.eq.s32.totalorder %s60, 0
    %s63 = sadd.s32 %s62, 1
    %s64 = scalar_select %p61, %s62, %s63
    %p67 = pneg %p61
    %p68 = scmp.eq.s32.totalorder %s10, 3
    %p69 = por %p67, %p68
    %p70 = scmp.ne.s32.totalorder %s62, %s65
    %p71 = scmp.eq.s32.totalorder %s10, 0
    %p72 = por %p70, %p71
    %p73 = scmp.ne.s32.totalorder %s62, %s65
    %p74 = scmp.eq.s32.totalorder %s15, 3
    %p75 = por %p73, %p74
    %p76 = scmp.ne.s32.totalorder %s65, %s66
    %p77 = scmp.eq.s32.totalorder %s15, 0
    %p78 = por %p76, %p77
    %p79 = scmp.ne.s32.totalorder %s65, %s66
    %p80 = scmp.eq.s32.totalorder %s16, 3
    %p81 = por %p79, %p80
    %p83 = scmp.ne.s32.totalorder %s66, %s82
    %p84 = scmp.eq.s32.totalorder %s16, 0
    %p85 = por %p83, %p84
    %s87 = sadd.s32 %s86, 1
    %p90 = scmp.eq.s32.totalorder %s10, 3
    %p91 = scmp.ne.s32.totalorder %s86, %s88
    %p92 = scmp.eq.s32.totalorder %s10, 0
    %p93 = por %p91, %p92
    %p94 = scmp.ne.s32.totalorder %s86, %s88
    %p95 = scmp.eq.s32.totalorder %s15, 3
    %p96 = por %p94, %p95
    %p97 = scmp.ne.s32.totalorder %s88, %s89
    %p98 = scmp.eq.s32.totalorder %s15, 0
    %p99 = por %p97, %p98
    %p100 = scmp.ne.s32.totalorder %s88, %s89
    %p101 = scmp.eq.s32.totalorder %s16, 3
    %p102 = por %p100, %p101
    %p104 = scmp.ne.s32.totalorder %s89, %s103
    %p105 = scmp.eq.s32.totalorder %s16, 0
    %p106 = por %p104, %p105
    %s108 = sadd.s32 %s107, 1
    %p111 = scmp.eq.s32.totalorder %s10, 3
    %p112 = scmp.ne.s32.totalorder %s107, %s109
    %p113 = scmp.eq.s32.totalorder %s10, 0
    %p114 = por %p112, %p113
    %p115 = scmp.ne.s32.totalorder %s107, %s109
    %p116 = scmp.eq.s32.totalorder %s15, 3
    %p117 = por %p115, %p116
    %p118 = scmp.ne.s32.totalorder %s109, %s110
    %p119 = scmp.eq.s32.totalorder %s15, 0
    %p120 = por %p118, %p119
    %p121 = scmp.ne.s32.totalorder %s109, %s110
    %p122 = scmp.eq.s32.totalorder %s16, 3
    %p123 = por %p121, %p122
    %p125 = scmp.ne.s32.totalorder %s110, %s124
    %p126 = scmp.eq.s32.totalorder %s16, 0
    %p127 = por %p125, %p126
    %s128 = ssub.s32 %s17, %s29
    %s129 = ssub.s32 %s18, %s25
    %s130 = sor.u32 %s128, %s129
    %p131 = scmp.eq.s32.totalorder %s130, 0
    %s133 = sadd.s32 %s132, 1
    %s134 = scalar_select %p131, %s132, %s133
    %p137 = pneg %p131
    %p138 = scmp.eq.s32.totalorder %s10, 3
    %p139 = por %p137, %p138
    %p140 = scmp.ne.s32.totalorder %s132, %s135
    %p141 = scmp.eq.s32.totalorder %s10, 0
    %p142 = por %p140, %p141
    %p143 = scmp.ne.s32.totalorder %s132, %s135
    %p144 = scmp.eq.s32.totalorder %s15, 3
    %p145 = por %p143, %p144
    %p146 = scmp.ne.s32.totalorder %s135, %s136
    %p147 = scmp.eq.s32.totalorder %s15, 0
    %p148 = por %p146, %p147
    %p149 = scmp.ne.s32.totalorder %s135, %s136
    %p150 = scmp.eq.s32.totalorder %s16, 3
    %p151 = por %p149, %p150
    %p153 = scmp.ne.s32.totalorder %s136, %s152
    %p154 = scmp.eq.s32.totalorder %s16, 0
    %p155 = por %p153, %p154
    %p156 = scmp.le.s32.totalorder 1, %s10
    %p157 = scmp.lt.s32.totalorder %s10, 5
    %p158 = pnand %p156, %p157
    %p159 = pneg %p158
    // Predicated region
    $region9: #{rdb_conv_forward.1} parent=5 // pred_check
      _
    $region10: #{rdb_conv_forward.1} parent=5 // pred_check_branch
      %161 = sbr.rel (%p158) target = $region12
    $region11: #{rdb_conv_forward.1} parent=5 // pred_region
      %s162 = ssub.s32 %s10, 1
      // Predicated region
      $region13: #{rdb_conv_forward.1} parent=11 // pred_check
        %p163 = pneg %p99
      $region14: #{rdb_conv_forward.1} parent=11 // pred_check_branch
        %165 = sbr.rel (%p163) target = $region16
      $region15: #{rdb_conv_forward.1} parent=11 // pred_region
        _
      $region16: #{rdb_conv_forward.1} parent=11 // pred_fallthru
        _
      // Predicated region
      $region17: #{rdb_conv_forward.1} parent=11 // pred_check
        %p166 = pneg %p120
      $region18: #{rdb_conv_forward.1} parent=11 // pred_check_branch
        %168 = sbr.rel (%p166) target = $region20
      $region19: #{rdb_conv_forward.1} parent=11 // pred_region
        _
      $region20: #{rdb_conv_forward.1} parent=11 // pred_fallthru
        _
    $region12: #{rdb_conv_forward.1} parent=5 // pred_fallthru
      _
    %p169 = scmp.lt.s32.totalorder %s10, 4
    // Predicated region
    $region21: #{rdb_conv_forward.1} parent=5 // pred_check
      %p170 = pneg %p169
    $region22: #{rdb_conv_forward.1} parent=5 // pred_check_branch
      %172 = sbr.rel (%p170) target = $region24
    $region23: #{rdb_conv_forward.1} parent=5 // pred_region
      // Predicated region
      $region25: #{rdb_conv_forward.1} parent=23 // pred_check
        %p173 = pneg %p44
      $region26: #{rdb_conv_forward.1} parent=23 // pred_check_branch
        %175 = sbr.rel (%p173) target = $region28
      $region27: #{rdb_conv_forward.1} parent=23 // pred_region
        %p176 = scmp.lt.s32.totalorder %s17, 1
        %s177 = scalar_select %p176, %s17, 1
        %p178 = scmp.lt.s32.totalorder %s18, 1
        %s179 = scalar_select %p178, %s18, 1
        %s180 = smul.addr %s179, 30
        %s181 = smul.addr %s177, 60
        %s182 = sadd.s32 %s180, %s181
        %s183 = smul.addr %s182, 4
        %s184 = scalar_lea.vmem %s0, %s183
      $region28: #{rdb_conv_forward.1} parent=23 // pred_fallthru
        _
      // Predicated region
      $region29: #{rdb_conv_forward.1} parent=23 // pred_check
        %p185 = pneg %p72
      $region30: #{rdb_conv_forward.1} parent=23 // pred_check_branch
        %187 = sbr.rel (%p185) target = $region32
      $region31: #{rdb_conv_forward.1} parent=23 // pred_region
        %s188 = smul.u32 8, %s18
        %p189 = scmp.lt.s32.totalorder %s17, 1
        %s190 = scalar_select %p189, %s17, 1
        %p191 = scmp.lt.s32.totalorder %s188, 15
        %s192 = scalar_select %p191, %s188, 15
        %s193 = smul.addr %s192, 2
        %s194 = smul.addr %s190, 32
        %s195 = sadd.s32 %s193, %s194
        %s196 = smul.addr %s195, 8
        %s197 = scalar_lea.vmem %s1, %s196
        %s198 = smul.u32 8, %s18
      $region32: #{rdb_conv_forward.1} parent=23 // pred_fallthru
        _
    $region24: #{rdb_conv_forward.1} parent=5 // pred_fallthru
      _
    %p199 = scmp.le.s32.totalorder 1, %s10
    %p200 = scmp.lt.s32.totalorder %s10, 5
    %p201 = pnand %p199, %p200
    %p202 = pneg %p201
    // Predicated region
    $region33: #{rdb_conv_forward.1} parent=5 // pred_check
      _
    $region34: #{rdb_conv_forward.1} parent=5 // pred_check_branch
      %204 = sbr.rel (%p201) target = $region36
    $region35: #{rdb_conv_forward.1} parent=5 // pred_region
      %s205 = ssub.s32 %s10, 1
      %p206 = scmp.lt.s32.totalorder %s19, 1
      %s207 = scalar_select %p206, %s19, 1
      %p208 = scmp.lt.s32.totalorder %s20, 1
      %s209 = scalar_select %p208, %s20, 1
      %s210 = smul.addr %s209, 30
      %s211 = smul.addr %s207, 60
      %s212 = sadd.s32 %s210, %s211
      %s213 = smul.addr %s212, 4
      %s214 = scalar_lea.vmem %s0, %s213
      %p215 = pneg %p50
      %p216 = pneg %p47
      %s217 = smul.u32 8, %s20
      %p218 = scmp.lt.s32.totalorder %s19, 1
      %s219 = scalar_select %p218, %s19, 1
      %p220 = scmp.lt.s32.totalorder %s217, 15
      %s221 = scalar_select %p220, %s217, 15
      %s222 = smul.addr %s221, 2
      %s223 = smul.addr %s219, 32
      %s224 = sadd.s32 %s222, %s223
      %s225 = smul.addr %s224, 8
      %s226 = scalar_lea.vmem %s1, %s225
      %p227 = pneg %p78
      %p228 = pneg %p75
      %p229 = pneg %p99
      %p230 = pneg %p96
      %p231 = pneg %p120
      %p232 = pneg %p117
      %p233 = pneg %p148
      %p234 = pneg %p145
      %s235 = smul.u32 8, %s20
      %p236 = scmp.lt.s32.totalorder %s19, 1
      %s237 = scalar_select %p236, %s19, 1
      %p238 = scmp.lt.s32.totalorder %s235, 15
      %s239 = scalar_select %p238, %s235, 15
      %s240 = smul.addr %s239, 2
      %s241 = smul.addr %s237, 32
      %s242 = sadd.s32 %s240, %s241
      %s243 = smul.addr %s242, 8
      %s244 = scalar_lea.vmem %s4, %s243
      %p245 = scmp.lt.s32.totalorder %s19, 1
      %s246 = scalar_select %p245, %s19, 1
      %p247 = scmp.lt.s32.totalorder %s20, 1
      %s248 = scalar_select %p247, %s20, 1
      %s249 = smul.addr %s248, 30
      %s250 = smul.addr %s246, 60
      %s251 = sadd.s32 %s249, %s250
      %s252 = smul.addr %s251, 4
      %s253 = scalar_lea.vmem %s0, %s252
      %s254 = smul.u32 8, %s20
      %p255 = scmp.lt.s32.totalorder %s19, 1
      %s256 = scalar_select %p255, %s19, 1
      %p257 = scmp.lt.s32.totalorder %s254, 15
      %s258 = scalar_select %p257, %s254, 15
      %s259 = smul.addr %s258, 2
      %s260 = smul.addr %s256, 32
      %s261 = sadd.s32 %s259, %s260
      %s262 = smul.addr %s261, 8
      %s263 = scalar_lea.vmem %s1, %s262
      %s264 = smul.u32 8, %s20
      %s265 = smul.u32 8, %s20
      %p266 = scmp.lt.s32.totalorder %s19, 1
      %s267 = scalar_select %p266, %s19, 1
      %p268 = scmp.lt.s32.totalorder %s265, 15
      %s269 = scalar_select %p268, %s265, 15
      %s270 = smul.addr %s269, 2
      %s271 = smul.addr %s267, 32
      %s272 = sadd.s32 %s270, %s271
      %s273 = smul.addr %s272, 8
      %s274 = scalar_lea.vmem %s4, %s273
      %s275 = smul.u32 8, %s20
      %v277 = vld [vmem:[%s253] sm:$0xf]
      %v278 = vld [vmem:[%s253 + $0x4] sm:$0xf]
      %v279 = vld [vmem:[%s253 + $0xc] sm:$0xf]
      %v280 = vld [vmem:[%s253 + $0x10] sm:$0xf]
      %v281 = vld [vmem:[%s253 + $0x18] sm:$0xf]
      %v282 = vld [vmem:[%s253 + $0x1c] sm:$0xf]
      %v283 = vld [vmem:[%s253 + $0x24] sm:$0xf]
      %v284 = vld [vmem:[%s253 + $0x28] sm:$0xf]
      %v285 = vld [vmem:[%s253 + $0x30] sm:$0xf]
      %v286 = vld [vmem:[%s253 + $0x34] sm:$0xf]
      %v287 = vld [vmem:[%s253 + $0x3c] sm:$0xf]
      %v288 = vld [vmem:[%s253 + $0x40] sm:$0xf]
      %v289 = vld [vmem:[%s253 + $0x48] sm:$0xf]
      %v290 = vld [vmem:[%s253 + $0x4c] sm:$0xf]
      %v291 = vld [vmem:[%s253 + $0x54] sm:$0xf]
      %v292 = vld [vmem:[%s253 + $0x58] sm:$0xf]
      %v293 = vld [vmem:[%s2] sm:$0x3]
      %v294 = vld [vmem:[%s253 + $0x8] sm:$0x1]
      %v295 = vld [vmem:[%s253 + $0x14] sm:$0x1]
      %v296 = vld [vmem:[%s253 + $0x20] sm:$0x1]
      %v297 = vld [vmem:[%s253 + $0x2c] sm:$0x1]
      %v298 = vld [vmem:[%s253 + $0x38] sm:$0x1]
      %v299 = vld [vmem:[%s253 + $0x44] sm:$0x1]
      %v300 = vld [vmem:[%s253 + $0x50] sm:$0x1]
      %v301 = vld [vmem:[%s253 + $0x5c] sm:$0x1]
      %vm302 = vsmask.f32 3328
      %vm303 = vsmask.f32 7440
      %vm304 = vmor %vm302, %vm303
      %v306 = vshrl.u32 %v277, 16
      %v308 = vrot.slane %v306, 4
      %v309 = vshll.u32 %v277, 16
      %v311 = vrot.slane %v309, 5
      %v312 = vor.u32 %v308, %v311
      %v313 = vrot.slane %v312, 4
      %v315 = vshll.u32 %v278, 16
      %v317 = vrot.slane %v315, 5
      %v318 = vsel %vm304, %v313, %v317
      %v319 = vshrl.u32 %v278, 16
      %v321 = vrot.slane %v319, 4
      %v322 = vor.u32 %v321, %v317
      %v323 = vrot.slane %v322, 4
      %v325 = vshll.u32 %v294, 16
      %v327 = vrot.slane %v325, 5
      %v328 = vsel %vm304, %v323, %v327
      %v330 = vshrl.u32 %v279, 16
      %v332 = vrot.slane %v330, 4
      %v333 = vshll.u32 %v279, 16
      %v335 = vrot.slane %v333, 5
      %v336 = vor.u32 %v332, %v335
      %v337 = vrot.slane %v336, 4
      %v339 = vshll.u32 %v280, 16
      %v341 = vrot.slane %v339, 5
      %v342 = vsel %vm304, %v337, %v341
      %v343 = vshrl.u32 %v280, 16
      %v345 = vrot.slane %v343, 4
      %v346 = vor.u32 %v345, %v341
      %v347 = vrot.slane %v346, 4
      %v349 = vshll.u32 %v295, 16
      %v351 = vrot.slane %v349, 5
      %v352 = vsel %vm304, %v347, %v351
      %v354 = vshrl.u32 %v281, 16
      %v356 = vrot.slane %v354, 4
      %v357 = vshll.u32 %v281, 16
      %v359 = vrot.slane %v357, 5
      %v360 = vor.u32 %v356, %v359
      %v361 = vrot.slane %v360, 4
      %v363 = vshll.u32 %v282, 16
      %v365 = vrot.slane %v363, 5
      %v366 = vsel %vm304, %v361, %v365
      %v367 = vshrl.u32 %v282, 16
      %v369 = vrot.slane %v367, 4
      %v370 = vor.u32 %v369, %v365
      %v371 = vrot.slane %v370, 4
      %v373 = vshll.u32 %v296, 16
      %v375 = vrot.slane %v373, 5
      %v376 = vsel %vm304, %v371, %v375
      %v378 = vshrl.u32 %v283, 16
      %v380 = vrot.slane %v378, 4
      %v381 = vshll.u32 %v283, 16
      %v383 = vrot.slane %v381, 5
      %v384 = vor.u32 %v380, %v383
      %v385 = vrot.slane %v384, 4
      %v387 = vshll.u32 %v284, 16
      %v389 = vrot.slane %v387, 5
      %v390 = vsel %vm304, %v385, %v389
      %v391 = vshrl.u32 %v284, 16
      %v393 = vrot.slane %v391, 4
      %v394 = vor.u32 %v393, %v389
      %v395 = vrot.slane %v394, 4
      %v397 = vshll.u32 %v297, 16
      %v399 = vrot.slane %v397, 5
      %v400 = vsel %vm304, %v395, %v399
      %v402 = vshrl.u32 %v285, 16
      %v404 = vrot.slane %v402, 4
      %v405 = vshll.u32 %v285, 16
      %v407 = vrot.slane %v405, 5
      %v408 = vor.u32 %v404, %v407
      %v409 = vrot.slane %v408, 4
      %v411 = vshll.u32 %v286, 16
      %v413 = vrot.slane %v411, 5
      %v414 = vsel %vm304, %v409, %v413
      %v415 = vshrl.u32 %v286, 16
      %v417 = vrot.slane %v415, 4
      %v418 = vor.u32 %v417, %v413
      %v419 = vrot.slane %v418, 4
      %v421 = vshll.u32 %v298, 16
      %v423 = vrot.slane %v421, 5
      %v424 = vsel %vm304, %v419, %v423
      %v426 = vshrl.u32 %v287, 16
      %v428 = vrot.slane %v426, 4
      %v429 = vshll.u32 %v287, 16
      %v431 = vrot.slane %v429, 5
      %v432 = vor.u32 %v428, %v431
      %v433 = vrot.slane %v432, 4
      %v435 = vshll.u32 %v288, 16
      %v437 = vrot.slane %v435, 5
      %v438 = vsel %vm304, %v433, %v437
      %v439 = vshrl.u32 %v288, 16
      %v441 = vrot.slane %v439, 4
      %v442 = vor.u32 %v441, %v437
      %v443 = vrot.slane %v442, 4
      %v445 = vshll.u32 %v299, 16
      %v447 = vrot.slane %v445, 5
      %v448 = vsel %vm304, %v443, %v447
      %v450 = vshrl.u32 %v289, 16
      %v452 = vrot.slane %v450, 4
      %v453 = vshll.u32 %v289, 16
      %v455 = vrot.slane %v453, 5
      %v456 = vor.u32 %v452, %v455
      %v457 = vrot.slane %v456, 4
      %v459 = vshll.u32 %v290, 16
      %v461 = vrot.slane %v459, 5
      %v462 = vsel %vm304, %v457, %v461
      %v463 = vshrl.u32 %v290, 16
      %v465 = vrot.slane %v463, 4
      %v466 = vor.u32 %v465, %v461
      %v467 = vrot.slane %v466, 4
      %v469 = vshll.u32 %v300, 16
      %v471 = vrot.slane %v469, 5
      %v472 = vsel %vm304, %v467, %v471
      %v474 = vshrl.u32 %v291, 16
      %v476 = vrot.slane %v474, 4
      %v477 = vshll.u32 %v291, 16
      %v479 = vrot.slane %v477, 5
      %v480 = vor.u32 %v476, %v479
      %v481 = vrot.slane %v480, 4
      %v483 = vshll.u32 %v292, 16
      %v485 = vrot.slane %v483, 5
      %v486 = vsel %vm304, %v481, %v485
      %v487 = vshrl.u32 %v292, 16
      %v489 = vrot.slane %v487, 4
      %v490 = vor.u32 %v489, %v485
      %v491 = vrot.slane %v490, 4
      %v493 = vshll.u32 %v301, 16
      %v495 = vrot.slane %v493, 5
      %v496 = vsel %vm304, %v491, %v495
      %s497 = scalar_lea.vmem %s2, 2
      %v498 = vld [vmem:[%s497] sm:$0x3]
      %v499 = vunpack.c.l.b16 %v318
      %v500 = vunpack.c.l.b16 %v328
      %v501 = vunpack.c.l.b16 %v342
      %v502 = vunpack.c.l.b16 %v352
      %v503 = vunpack.c.l.b16 %v366
      %v504 = vunpack.c.l.b16 %v376
      %v505 = vunpack.c.l.b16 %v390
      %v506 = vunpack.c.l.b16 %v400
      %v507 = vunpack.c.l.b16 %v414
      %v508 = vunpack.c.l.b16 %v424
      %v509 = vunpack.c.l.b16 %v438
      %v510 = vunpack.c.l.b16 %v448
      %v511 = vunpack.c.l.b16 %v462
      %v512 = vunpack.c.l.b16 %v472
      %v513 = vunpack.c.l.b16 %v486
      %v514 = vunpack.c.l.b16 %v496
      %v515 = vpack.c.b16 %v500, %v499
      %v516 = vpack.c.b16 %v502, %v501
      %v517 = vpack.c.b16 %v504, %v503
      %v518 = vpack.c.b16 %v506, %v505
      %v519 = vpack.c.b16 %v508, %v507
      %v520 = vpack.c.b16 %v510, %v509
      %v521 = vpack.c.b16 %v512, %v511
      %v522 = vpack.c.b16 %v514, %v513
      %vm523 = vcmask 31744
      %v525 = vsel %vm523, %v515, 0
      %v528 = vsel %vm523, %v516, 0
      %v531 = vsel %vm523, %v517, 0
      %v534 = vsel %vm523, %v518, 0
      %v537 = vsel %vm523, %v519, 0
      %v540 = vsel %vm523, %v520, 0
      %v543 = vsel %vm523, %v521, 0
      %v546 = vsel %vm523, %v522, 0
      %vm548 = vcmask 1041408
      %v550 = vsel %vm548, %v498, 0
      %552 = vmatpush.bf16.msra.mxu0 0
      %553 = vmatpush.bf16.msra.mxu0 0
      %554 = vmatpush.bf16.msra.mxu0 0
      %555 = vmatpush.bf16.msra.mxu0 0
      %556 = vmatpush.bf16.msra.mxu0 0
      %557 = vmatpush.bf16.msra.mxu0 0
      %558 = vmatpush.bf16.msra.mxu0 0
      %559 = vmatpush.bf16.msra.mxu0 %v550
      %560 = vmatmul.bf16.gmra.mxu0 %v525
      %v561 = vpop.f32.mrf.mxu0
      %v562 = vadd.f32 0.0, %v561
      %v563 = vpop.f32.mrf.mxu0
      %v564 = vadd.f32 0.0, %v563
      %565 = vmatmul.bf16.gmra.mxu0 %v528
      %v566 = vpop.f32.mrf.mxu0
      %v567 = vadd.f32 0.0, %v566
      %v568 = vpop.f32.mrf.mxu0
      %v569 = vadd.f32 0.0, %v568
      %570 = vmatmul.bf16.gmra.mxu0 %v531
      %v571 = vpop.f32.mrf.mxu0
      %v572 = vadd.f32 0.0, %v571
      %v573 = vpop.f32.mrf.mxu0
      %v574 = vadd.f32 0.0, %v573
      %575 = vmatmul.bf16.gmra.mxu0 %v534
      %v576 = vpop.f32.mrf.mxu0
      %v577 = vadd.f32 0.0, %v576
      %v578 = vpop.f32.mrf.mxu0
      %v579 = vadd.f32 0.0, %v578
      %580 = vmatmul.bf16.gmra.mxu0 %v537
      %v581 = vpop.f32.mrf.mxu0
      %v582 = vadd.f32 0.0, %v581
      %v583 = vpop.f32.mrf.mxu0
      %v584 = vadd.f32 0.0, %v583
      %585 = vmatmul.bf16.gmra.mxu0 %v540
      %v586 = vpop.f32.mrf.mxu0
      %v587 = vadd.f32 0.0, %v586
      %v588 = vpop.f32.mrf.mxu0
      %v589 = vadd.f32 0.0, %v588
      %590 = vmatmul.bf16.gmra.mxu0 %v543
      %v591 = vpop.f32.mrf.mxu0
      %v592 = vadd.f32 0.0, %v591
      %v593 = vpop.f32.mrf.mxu0
      %v594 = vadd.f32 0.0, %v593
      %595 = vmatmul.bf16.gmra.mxu0 %v546
      %v596 = vpop.f32.mrf.mxu0
      %v597 = vadd.f32 0.0, %v596
      %v598 = vpop.f32.mrf.mxu0
      %v599 = vadd.f32 0.0, %v598
      %600 = vdwg.mxu0
      %v617 = vunpack.c.l.b16 %v277
      %v618 = vunpack.c.l.b16 %v278
      %v619 = vunpack.c.l.b16 %v279
      %v620 = vunpack.c.l.b16 %v280
      %v621 = vunpack.c.l.b16 %v281
      %v622 = vunpack.c.l.b16 %v282
      %v623 = vunpack.c.l.b16 %v283
      %v624 = vunpack.c.l.b16 %v284
      %v625 = vunpack.c.l.b16 %v285
      %v626 = vunpack.c.l.b16 %v286
      %v627 = vunpack.c.l.b16 %v287
      %v628 = vunpack.c.l.b16 %v288
      %v629 = vunpack.c.l.b16 %v289
      %v630 = vunpack.c.l.b16 %v290
      %v631 = vunpack.c.l.b16 %v291
      %v632 = vunpack.c.l.b16 %v292
      %v633 = vpack.c.b16 %v618, %v617
      %v634 = vpack.c.b16 %v620, %v619
      %v635 = vpack.c.b16 %v622, %v621
      %v636 = vpack.c.b16 %v624, %v623
      %v637 = vpack.c.b16 %v626, %v625
      %v638 = vpack.c.b16 %v628, %v627
      %v639 = vpack.c.b16 %v630, %v629
      %v640 = vpack.c.b16 %v632, %v631
      %v642 = vsel %vm523, %v633, 0
      %v645 = vsel %vm523, %v634, 0
      %v648 = vsel %vm523, %v635, 0
      %v651 = vsel %vm523, %v636, 0
      %v654 = vsel %vm523, %v637, 0
      %v657 = vsel %vm523, %v638, 0
      %v660 = vsel %vm523, %v639, 0
      %v663 = vsel %vm523, %v640, 0
      %v666 = vsel %vm548, %v293, 0
      %668 = vmatpush.bf16.msra.mxu0 0
      %669 = vmatpush.bf16.msra.mxu0 0
      %670 = vmatpush.bf16.msra.mxu0 0
      %671 = vmatpush.bf16.msra.mxu0 0
      %672 = vmatpush.bf16.msra.mxu0 0
      %673 = vmatpush.bf16.msra.mxu0 0
      %674 = vmatpush.bf16.msra.mxu0 0
      %675 = vmatpush.bf16.msra.mxu0 %v666
      %676 = vmatmul.bf16.gmra.mxu0 %v642
      %v677 = vpop.f32.mrf.mxu0
      %v678 = vadd.f32 %v562, %v677
      %v679 = vpop.f32.mrf.mxu0
      %v680 = vadd.f32 %v564, %v679
      %681 = vmatmul.bf16.gmra.mxu0 %v645
      %v682 = vpop.f32.mrf.mxu0
      %v683 = vadd.f32 %v567, %v682
      %v684 = vpop.f32.mrf.mxu0
      %v685 = vadd.f32 %v569, %v684
      %686 = vmatmul.bf16.gmra.mxu0 %v648
      %v687 = vpop.f32.mrf.mxu0
      %v688 = vadd.f32 %v572, %v687
      %v689 = vpop.f32.mrf.mxu0
      %v690 = vadd.f32 %v574, %v689
      %691 = vmatmul.bf16.gmra.mxu0 %v651
      %v692 = vpop.f32.mrf.mxu0
      %v693 = vadd.f32 %v577, %v692
      %v694 = vpop.f32.mrf.mxu0
      %v695 = vadd.f32 %v579, %v694
      %696 = vmatmul.bf16.gmra.mxu0 %v654
      %v697 = vpop.f32.mrf.mxu0
      %v698 = vadd.f32 %v582, %v697
      %v699 = vpop.f32.mrf.mxu0
      %v700 = vadd.f32 %v584, %v699
      %701 = vmatmul.bf16.gmra.mxu0 %v657
      %v702 = vpop.f32.mrf.mxu0
      %v703 = vadd.f32 %v587, %v702
      %v704 = vpop.f32.mrf.mxu0
      %v705 = vadd.f32 %v589, %v704
      %706 = vmatmul.bf16.gmra.mxu0 %v660
      %v707 = vpop.f32.mrf.mxu0
      %v708 = vadd.f32 %v592, %v707
      %v709 = vpop.f32.mrf.mxu0
      %v710 = vadd.f32 %v594, %v709
      %711 = vmatmul.bf16.gmra.mxu0 %v663
      %v712 = vpop.f32.mrf.mxu0
      %v713 = vadd.f32 %v597, %v712
      %v714 = vpop.f32.mrf.mxu0
      %v715 = vadd.f32 %v599, %v714
      %716 = vdwg.mxu0
      %v717 = vld [vmem:[%s253] sm:$0xe]
      %v718 = vld [vmem:[%s253 + $0xc] sm:$0xe]
      %v719 = vld [vmem:[%s253 + $0x18] sm:$0xe]
      %v720 = vld [vmem:[%s253 + $0x24] sm:$0xe]
      %v721 = vld [vmem:[%s253 + $0x30] sm:$0xe]
      %v722 = vld [vmem:[%s253 + $0x3c] sm:$0xe]
      %v723 = vld [vmem:[%s253 + $0x48] sm:$0xe]
      %v724 = vld [vmem:[%s253 + $0x54] sm:$0xe]
      %vm741 = vcmask 1042432
      %vm742 = vcmask 1046532
      %vm743 = vmor %vm741, %vm742
      %v744 = vrot.slane %v717, 5
      %v745 = vrot.slane %v744, 4
      %v746 = vrot.slane %v278, 5
      %v747 = vsel %vm743, %v745, %v746
      %v748 = vrot.slane %v746, 4
      %v749 = vrot.slane %v294, 5
      %v750 = vsel %vm743, %v748, %v749
      %v751 = vrot.slane %v718, 5
      %v752 = vrot.slane %v751, 4
      %v753 = vrot.slane %v280, 5
      %v754 = vsel %vm743, %v752, %v753
      %v755 = vrot.slane %v753, 4
      %v756 = vrot.slane %v295, 5
      %v757 = vsel %vm743, %v755, %v756
      %v758 = vrot.slane %v719, 5
      %v759 = vrot.slane %v758, 4
      %v760 = vrot.slane %v282, 5
      %v761 = vsel %vm743, %v759, %v760
      %v762 = vrot.slane %v760, 4
      %v763 = vrot.slane %v296, 5
      %v764 = vsel %vm743, %v762, %v763
      %v765 = vrot.slane %v720, 5
      %v766 = vrot.slane %v765, 4
      %v767 = vrot.slane %v284, 5
      %v768 = vsel %vm743, %v766, %v767
      %v769 = vrot.slane %v767, 4
      %v770 = vrot.slane %v297, 5
      %v771 = vsel %vm743, %v769, %v770
      %v772 = vrot.slane %v721, 5
      %v773 = vrot.slane %v772, 4
      %v774 = vrot.slane %v286, 5
      %v775 = vsel %vm743, %v773, %v774
      %v776 = vrot.slane %v774, 4
      %v777 = vrot.slane %v298, 5
      %v778 = vsel %vm743, %v776, %v777
      %v779 = vrot.slane %v722, 5
      %v780 = vrot.slane %v779, 4
      %v781 = vrot.slane %v288, 5
      %v782 = vsel %vm743, %v780, %v781
      %v783 = vrot.slane %v781, 4
      %v784 = vrot.slane %v299, 5
      %v785 = vsel %vm743, %v783, %v784
      %v786 = vrot.slane %v723, 5
      %v787 = vrot.slane %v786, 4
      %v788 = vrot.slane %v290, 5
      %v789 = vsel %vm743, %v787, %v788
      %v790 = vrot.slane %v788, 4
      %v791 = vrot.slane %v300, 5
      %v792 = vsel %vm743, %v790, %v791
      %v793 = vrot.slane %v724, 5
      %v794 = vrot.slane %v793, 4
      %v795 = vrot.slane %v292, 5
      %v796 = vsel %vm743, %v794, %v795
      %v797 = vrot.slane %v795, 4
      %v798 = vrot.slane %v301, 5
      %v799 = vsel %vm743, %v797, %v798
      %s800 = scalar_lea.vmem %s2, 4
      %v801 = vld [vmem:[%s800] sm:$0x3]
      %v802 = vunpack.c.l.b16 %v747
      %v803 = vunpack.c.l.b16 %v750
      %v804 = vunpack.c.l.b16 %v754
      %v805 = vunpack.c.l.b16 %v757
      %v806 = vunpack.c.l.b16 %v761
      %v807 = vunpack.c.l.b16 %v764
      %v808 = vunpack.c.l.b16 %v768
      %v809 = vunpack.c.l.b16 %v771
      %v810 = vunpack.c.l.b16 %v775
      %v811 = vunpack.c.l.b16 %v778
      %v812 = vunpack.c.l.b16 %v782
      %v813 = vunpack.c.l.b16 %v785
      %v814 = vunpack.c.l.b16 %v789
      %v815 = vunpack.c.l.b16 %v792
      %v816 = vunpack.c.l.b16 %v796
      %v817 = vunpack.c.l.b16 %v799
      %v818 = vpack.c.b16 %v803, %v802
      %v819 = vpack.c.b16 %v805, %v804
      %v820 = vpack.c.b16 %v807, %v806
      %v821 = vpack.c.b16 %v809, %v808
      %v822 = vpack.c.b16 %v811, %v810
      %v823 = vpack.c.b16 %v813, %v812
      %v824 = vpack.c.b16 %v815, %v814
      %v825 = vpack.c.b16 %v817, %v816
      %v827 = vsel %vm523, %v818, 0
      %v830 = vsel %vm523, %v819, 0
      %v833 = vsel %vm523, %v820, 0
      %v836 = vsel %vm523, %v821, 0
      %v839 = vsel %vm523, %v822, 0
      %v842 = vsel %vm523, %v823, 0
      %v845 = vsel %vm523, %v824, 0
      %v848 = vsel %vm523, %v825, 0
      %v851 = vsel %vm548, %v801, 0
      %853 = vmatpush.bf16.msra.mxu0 0
      %854 = vmatpush.bf16.msra.mxu0 0
      %855 = vmatpush.bf16.msra.mxu0 0
      %856 = vmatpush.bf16.msra.mxu0 0
      %857 = vmatpush.bf16.msra.mxu0 0
      %858 = vmatpush.bf16.msra.mxu0 0
      %859 = vmatpush.bf16.msra.mxu0 0
      %860 = vmatpush.bf16.msra.mxu0 %v851
      %861 = vmatmul.bf16.gmra.mxu0 %v827
      %v862 = vpop.f32.mrf.mxu0
      %v863 = vadd.f32 0.0, %v862
      %v864 = vpop.f32.mrf.mxu0
      %v865 = vadd.f32 0.0, %v864
      %866 = vmatmul.bf16.gmra.mxu0 %v830
      %v867 = vpop.f32.mrf.mxu0
      %v868 = vadd.f32 0.0, %v867
      %v869 = vpop.f32.mrf.mxu0
      %v870 = vadd.f32 0.0, %v869
      %871 = vmatmul.bf16.gmra.mxu0 %v833
      %v872 = vpop.f32.mrf.mxu0
      %v873 = vadd.f32 0.0, %v872
      %v874 = vpop.f32.mrf.mxu0
      %v875 = vadd.f32 0.0, %v874
      %876 = vmatmul.bf16.gmra.mxu0 %v836
      %v877 = vpop.f32.mrf.mxu0
      %v878 = vadd.f32 0.0, %v877
      %v879 = vpop.f32.mrf.mxu0
      %v880 = vadd.f32 0.0, %v879
      %881 = vmatmul.bf16.gmra.mxu0 %v839
      %v882 = vpop.f32.mrf.mxu0
      %v883 = vadd.f32 0.0, %v882
      %v884 = vpop.f32.mrf.mxu0
      %v885 = vadd.f32 0.0, %v884
      %886 = vmatmul.bf16.gmra.mxu0 %v842
      %v887 = vpop.f32.mrf.mxu0
      %v888 = vadd.f32 0.0, %v887
      %v889 = vpop.f32.mrf.mxu0
      %v890 = vadd.f32 0.0, %v889
      %891 = vmatmul.bf16.gmra.mxu0 %v845
      %v892 = vpop.f32.mrf.mxu0
      %v893 = vadd.f32 0.0, %v892
      %v894 = vpop.f32.mrf.mxu0
      %v895 = vadd.f32 0.0, %v894
      %896 = vmatmul.bf16.gmra.mxu0 %v848
      %v897 = vpop.f32.mrf.mxu0
      %v898 = vadd.f32 0.0, %v897
      %v899 = vpop.f32.mrf.mxu0
      %v900 = vadd.f32 0.0, %v899
      %901 = vdwg.mxu0
      %v902 = vadd.f32 %v678, %v863
      %v903 = vadd.f32 %v680, %v865
      %v904 = vadd.f32 %v683, %v868
      %v905 = vadd.f32 %v685, %v870
      %v906 = vadd.f32 %v688, %v873
      %v907 = vadd.f32 %v690, %v875
      %v908 = vadd.f32 %v693, %v878
      %v909 = vadd.f32 %v695, %v880
      %v910 = vadd.f32 %v698, %v883
      %v911 = vadd.f32 %v700, %v885
      %v912 = vadd.f32 %v703, %v888
      %v913 = vadd.f32 %v705, %v890
      %v914 = vadd.f32 %v708, %v893
      %v915 = vadd.f32 %v710, %v895
      %v916 = vadd.f32 %v713, %v898
      %v917 = vadd.f32 %v715, %v900
      %s918 = scalar_lea.vmem %s253, 12
      %v919 = vld [vmem:[%s918] sm:$0xf]
      %v920 = vld [vmem:[%s918 + $0x4] sm:$0xf]
      %v921 = vld [vmem:[%s918 + $0xc] sm:$0xf]
      %v922 = vld [vmem:[%s918 + $0x10] sm:$0xf]
      %v923 = vld [vmem:[%s918 + $0x18] sm:$0xf]
      %v924 = vld [vmem:[%s918 + $0x1c] sm:$0xf]
      %v925 = vld [vmem:[%s918 + $0x24] sm:$0xf]
      %v926 = vld [vmem:[%s918 + $0x28] sm:$0xf]
      %v927 = vld [vmem:[%s918 + $0x30] sm:$0xf]
      %v928 = vld [vmem:[%s918 + $0x34] sm:$0xf]
      %v929 = vld [vmem:[%s918 + $0x3c] sm:$0xf]
      %v930 = vld [vmem:[%s918 + $0x40] sm:$0xf]
      %v931 = vld [vmem:[%s918 + $0x48] sm:$0xf]
      %v932 = vld [vmem:[%s918 + $0x4c] sm:$0xf]
      %v933 = vld [vmem:[%s918 + $0x54] sm:$0xf]
      %v934 = vld [vmem:[%s918 + $0x58] sm:$0xf]
      %s935 = scalar_lea.vmem %s2, 6
      %v936 = vld [vmem:[%s935] sm:$0x3]
      %v953 = vunpack.c.l.b16 %v919
      %v954 = vunpack.c.l.b16 %v920
      %v955 = vunpack.c.l.b16 %v921
      %v956 = vunpack.c.l.b16 %v922
      %v957 = vunpack.c.l.b16 %v923
      %v958 = vunpack.c.l.b16 %v924
      %v959 = vunpack.c.l.b16 %v925
      %v960 = vunpack.c.l.b16 %v926
      %v961 = vunpack.c.l.b16 %v927
      %v962 = vunpack.c.l.b16 %v928
      %v963 = vunpack.c.l.b16 %v929
      %v964 = vunpack.c.l.b16 %v930
      %v965 = vunpack.c.l.b16 %v931
      %v966 = vunpack.c.l.b16 %v932
      %v967 = vunpack.c.l.b16 %v933
      %v968 = vunpack.c.l.b16 %v934
      %v969 = vpack.c.b16 %v954, %v953
      %v970 = vpack.c.b16 %v956, %v955
      %v971 = vpack.c.b16 %v958, %v957
      %v972 = vpack.c.b16 %v960, %v959
      %v973 = vpack.c.b16 %v962, %v961
      %v974 = vpack.c.b16 %v964, %v963
      %v975 = vpack.c.b16 %v966, %v965
      %v976 = vpack.c.b16 %v968, %v967
      %v978 = vsel %vm523, %v969, 0
      %v981 = vsel %vm523, %v970, 0
      %v984 = vsel %vm523, %v971, 0
      %v987 = vsel %vm523, %v972, 0
      %v990 = vsel %vm523, %v973, 0
      %v993 = vsel %vm523, %v974, 0
      %v996 = vsel %vm523, %v975, 0
      %v999 = vsel %vm523, %v976, 0
      %v1002 = vsel %vm548, %v936, 0
      %1004 = vmatpush.bf16.msra.mxu0 0
      %1005 = vmatpush.bf16.msra.mxu0 0
      %1006 = vmatpush.bf16.msra.mxu0 0
      %1007 = vmatpush.bf16.msra.mxu0 0
      %1008 = vmatpush.bf16.msra.mxu0 0
      %1009 = vmatpush.bf16.msra.mxu0 0
      %1010 = vmatpush.bf16.msra.mxu0 0
      %1011 = vmatpush.bf16.msra.mxu0 %v1002
      %1012 = vmatmul.bf16.gmra.mxu0 %v978
      %v1013 = vpop.f32.mrf.mxu0
      %v1014 = vadd.f32 0.0, %v1013
      %v1015 = vpop.f32.mrf.mxu0
      %v1016 = vadd.f32 0.0, %v1015
      %1017 = vmatmul.bf16.gmra.mxu0 %v981
      %v1018 = vpop.f32.mrf.mxu0
      %v1019 = vadd.f32 0.0, %v1018
      %v1020 = vpop.f32.mrf.mxu0
      %v1021 = vadd.f32 0.0, %v1020
      %1022 = vmatmul.bf16.gmra.mxu0 %v984
      %v1023 = vpop.f32.mrf.mxu0
      %v1024 = vadd.f32 0.0, %v1023
      %v1025 = vpop.f32.mrf.mxu0
      %v1026 = vadd.f32 0.0, %v1025
      %1027 = vmatmul.bf16.gmra.mxu0 %v987
      %v1028 = vpop.f32.mrf.mxu0
      %v1029 = vadd.f32 0.0, %v1028
      %v1030 = vpop.f32.mrf.mxu0
      %v1031 = vadd.f32 0.0, %v1030
      %1032 = vmatmul.bf16.gmra.mxu0 %v990
      %v1033 = vpop.f32.mrf.mxu0
      %v1034 = vadd.f32 0.0, %v1033
      %v1035 = vpop.f32.mrf.mxu0
      %v1036 = vadd.f32 0.0, %v1035
      %1037 = vmatmul.bf16.gmra.mxu0 %v993
      %v1038 = vpop.f32.mrf.mxu0
      %v1039 = vadd.f32 0.0, %v1038
      %v1040 = vpop.f32.mrf.mxu0
      %v1041 = vadd.f32 0.0, %v1040
      %1042 = vmatmul.bf16.gmra.mxu0 %v996
      %v1043 = vpop.f32.mrf.mxu0
      %v1044 = vadd.f32 0.0, %v1043
      %v1045 = vpop.f32.mrf.mxu0
      %v1046 = vadd.f32 0.0, %v1045
      %1047 = vmatmul.bf16.gmra.mxu0 %v999
      %v1048 = vpop.f32.mrf.mxu0
      %v1049 = vadd.f32 0.0, %v1048
      %v1050 = vpop.f32.mrf.mxu0
      %v1051 = vadd.f32 0.0, %v1050
      %1052 = vdwg.mxu0
      %v1053 = vadd.f32 %v902, %v1014
      %v1054 = vadd.f32 %v903, %v1016
      %v1055 = vadd.f32 %v904, %v1019
      %v1056 = vadd.f32 %v905, %v1021
      %v1057 = vadd.f32 %v906, %v1024
      %v1058 = vadd.f32 %v907, %v1026
      %v1059 = vadd.f32 %v908, %v1029
      %v1060 = vadd.f32 %v909, %v1031
      %v1061 = vadd.f32 %v910, %v1034
      %v1062 = vadd.f32 %v911, %v1036
      %v1063 = vadd.f32 %v912, %v1039
      %v1064 = vadd.f32 %v913, %v1041
      %v1065 = vadd.f32 %v914, %v1044
      %v1066 = vadd.f32 %v915, %v1046
      %v1067 = vadd.f32 %v916, %v1049
      %v1068 = vadd.f32 %v917, %v1051
      %v1069 = vld [vmem:[%s918] sm:$0xf]
      %v1070 = vld [vmem:[%s918 + $0x4] sm:$0xf]
      %v1071 = vld [vmem:[%s918 + $0x8] sm:$0x1]
      %v1072 = vld [vmem:[%s918 + $0xc] sm:$0xf]
      %v1073 = vld [vmem:[%s918 + $0x10] sm:$0xf]
      %v1074 = vld [vmem:[%s918 + $0x14] sm:$0x1]
      %v1075 = vld [vmem:[%s918 + $0x18] sm:$0xf]
      %v1076 = vld [vmem:[%s918 + $0x1c] sm:$0xf]
      %v1077 = vld [vmem:[%s918 + $0x20] sm:$0x1]
      %v1078 = vld [vmem:[%s918 + $0x24] sm:$0xf]
      %v1079 = vld [vmem:[%s918 + $0x28] sm:$0xf]
      %v1080 = vld [vmem:[%s918 + $0x2c] sm:$0x1]
      %v1081 = vld [vmem:[%s918 + $0x30] sm:$0xf]
      %v1082 = vld [vmem:[%s918 + $0x34] sm:$0xf]
      %v1083 = vld [vmem:[%s918 + $0x38] sm:$0x1]
      %v1084 = vld [vmem:[%s918 + $0x3c] sm:$0xf]
      %v1085 = vld [vmem:[%s918 + $0x40] sm:$0xf]
      %v1086 = vld [vmem:[%s918 + $0x44] sm:$0x1]
      %v1087 = vld [vmem:[%s918 + $0x48] sm:$0xf]
      %v1088 = vld [vmem:[%s918 + $0x4c] sm:$0xf]
      %v1089 = vld [vmem:[%s918 + $0x50] sm:$0x1]
      %v1090 = vld [vmem:[%s918 + $0x54] sm:$0xf]
      %v1091 = vld [vmem:[%s918 + $0x58] sm:$0xf]
      %v1092 = vld [vmem:[%s918 + $0x5c] sm:$0x1]
      %v1094 = vshrl.u32 %v1069, 16
      %v1096 = vrot.slane %v1094, 4
      %v1097 = vshll.u32 %v1069, 16
      %v1099 = vrot.slane %v1097, 5
      %v1100 = vor.u32 %v1096, %v1099
      %v1101 = vrot.slane %v1100, 4
      %v1103 = vshll.u32 %v1070, 16
      %v1105 = vrot.slane %v1103, 5
      %v1106 = vsel %vm304, %v1101, %v1105
      %v1107 = vshrl.u32 %v1070, 16
      %v1109 = vrot.slane %v1107, 4
      %v1110 = vor.u32 %v1109, %v1105
      %v1111 = vrot.slane %v1110, 4
      %v1113 = vshll.u32 %v1071, 16
      %v1115 = vrot.slane %v1113, 5
      %v1116 = vsel %vm304, %v1111, %v1115
      %v1118 = vshrl.u32 %v1072, 16
      %v1120 = vrot.slane %v1118, 4
      %v1121 = vshll.u32 %v1072, 16
      %v1123 = vrot.slane %v1121, 5
      %v1124 = vor.u32 %v1120, %v1123
      %v1125 = vrot.slane %v1124, 4
      %v1127 = vshll.u32 %v1073, 16
      %v1129 = vrot.slane %v1127, 5
      %v1130 = vsel %vm304, %v1125, %v1129
      %v1131 = vshrl.u32 %v1073, 16
      %v1133 = vrot.slane %v1131, 4
      %v1134 = vor.u32 %v1133, %v1129
      %v1135 = vrot.slane %v1134, 4
      %v1137 = vshll.u32 %v1074, 16
      %v1139 = vrot.slane %v1137, 5
      %v1140 = vsel %vm304, %v1135, %v1139
      %v1142 = vshrl.u32 %v1075, 16
      %v1144 = vrot.slane %v1142, 4
      %v1145 = vshll.u32 %v1075, 16
      %v1147 = vrot.slane %v1145, 5
      %v1148 = vor.u32 %v1144, %v1147
      %v1149 = vrot.slane %v1148, 4
      %v1151 = vshll.u32 %v1076, 16
      %v1153 = vrot.slane %v1151, 5
      %v1154 = vsel %vm304, %v1149, %v1153
      %v1155 = vshrl.u32 %v1076, 16
      %v1157 = vrot.slane %v1155, 4
      %v1158 = vor.u32 %v1157, %v1153
      %v1159 = vrot.slane %v1158, 4
      %v1161 = vshll.u32 %v1077, 16
      %v1163 = vrot.slane %v1161, 5
      %v1164 = vsel %vm304, %v1159, %v1163
      %v1166 = vshrl.u32 %v1078, 16
      %v1168 = vrot.slane %v1166, 4
      %v1169 = vshll.u32 %v1078, 16
      %v1171 = vrot.slane %v1169, 5
      %v1172 = vor.u32 %v1168, %v1171
      %v1173 = vrot.slane %v1172, 4
      %v1175 = vshll.u32 %v1079, 16
      %v1177 = vrot.slane %v1175, 5
      %v1178 = vsel %vm304, %v1173, %v1177
      %v1179 = vshrl.u32 %v1079, 16
      %v1181 = vrot.slane %v1179, 4
      %v1182 = vor.u32 %v1181, %v1177
      %v1183 = vrot.slane %v1182, 4
      %v1185 = vshll.u32 %v1080, 16
      %v1187 = vrot.slane %v1185, 5
      %v1188 = vsel %vm304, %v1183, %v1187
      %v1190 = vshrl.u32 %v1081, 16
      %v1192 = vrot.slane %v1190, 4
      %v1193 = vshll.u32 %v1081, 16
      %v1195 = vrot.slane %v1193, 5
      %v1196 = vor.u32 %v1192, %v1195
      %v1197 = vrot.slane %v1196, 4
      %v1199 = vshll.u32 %v1082, 16
      %v1201 = vrot.slane %v1199, 5
      %v1202 = vsel %vm304, %v1197, %v1201
      %v1203 = vshrl.u32 %v1082, 16
      %v1205 = vrot.slane %v1203, 4
      %v1206 = vor.u32 %v1205, %v1201
      %v1207 = vrot.slane %v1206, 4
      %v1209 = vshll.u32 %v1083, 16
      %v1211 = vrot.slane %v1209, 5
      %v1212 = vsel %vm304, %v1207, %v1211
      %v1214 = vshrl.u32 %v1084, 16
      %v1216 = vrot.slane %v1214, 4
      %v1217 = vshll.u32 %v1084, 16
      %v1219 = vrot.slane %v1217, 5
      %v1220 = vor.u32 %v1216, %v1219
      %v1221 = vrot.slane %v1220, 4
      %v1223 = vshll.u32 %v1085, 16
      %v1225 = vrot.slane %v1223, 5
      %v1226 = vsel %vm304, %v1221, %v1225
      %v1227 = vshrl.u32 %v1085, 16
      %v1229 = vrot.slane %v1227, 4
      %v1230 = vor.u32 %v1229, %v1225
      %v1231 = vrot.slane %v1230, 4
      %v1233 = vshll.u32 %v1086, 16
      %v1235 = vrot.slane %v1233, 5
      %v1236 = vsel %vm304, %v1231, %v1235
      %v1238 = vshrl.u32 %v1087, 16
      %v1240 = vrot.slane %v1238, 4
      %v1241 = vshll.u32 %v1087, 16
      %v1243 = vrot.slane %v1241, 5
      %v1244 = vor.u32 %v1240, %v1243
      %v1245 = vrot.slane %v1244, 4
      %v1247 = vshll.u32 %v1088, 16
      %v1249 = vrot.slane %v1247, 5
      %v1250 = vsel %vm304, %v1245, %v1249
      %v1251 = vshrl.u32 %v1088, 16
      %v1253 = vrot.slane %v1251, 4
      %v1254 = vor.u32 %v1253, %v1249
      %v1255 = vrot.slane %v1254, 4
      %v1257 = vshll.u32 %v1089, 16
      %v1259 = vrot.slane %v1257, 5
      %v1260 = vsel %vm304, %v1255, %v1259
      %v1262 = vshrl.u32 %v1090, 16
      %v1264 = vrot.slane %v1262, 4
      %v1265 = vshll.u32 %v1090, 16
      %v1267 = vrot.slane %v1265, 5
      %v1268 = vor.u32 %v1264, %v1267
      %v1269 = vrot.slane %v1268, 4
      %v1271 = vshll.u32 %v1091, 16
      %v1273 = vrot.slane %v1271, 5
      %v1274 = vsel %vm304, %v1269, %v1273
      %v1275 = vshrl.u32 %v1091, 16
      %v1277 = vrot.slane %v1275, 4
      %v1278 = vor.u32 %v1277, %v1273
      %v1279 = vrot.slane %v1278, 4
      %v1281 = vshll.u32 %v1092, 16
      %v1283 = vrot.slane %v1281, 5
      %v1284 = vsel %vm304, %v1279, %v1283
      %s1285 = scalar_lea.vmem %s2, 8
      %v1286 = vld [vmem:[%s1285] sm:$0x3]
      %v1287 = vunpack.c.l.b16 %v1106
      %v1288 = vunpack.c.l.b16 %v1116
      %v1289 = vunpack.c.l.b16 %v1130
      %v1290 = vunpack.c.l.b16 %v1140
      %v1291 = vunpack.c.l.b16 %v1154
      %v1292 = vunpack.c.l.b16 %v1164
      %v1293 = vunpack.c.l.b16 %v1178
      %v1294 = vunpack.c.l.b16 %v1188
      %v1295 = vunpack.c.l.b16 %v1202
      %v1296 = vunpack.c.l.b16 %v1212
      %v1297 = vunpack.c.l.b16 %v1226
      %v1298 = vunpack.c.l.b16 %v1236
      %v1299 = vunpack.c.l.b16 %v1250
      %v1300 = vunpack.c.l.b16 %v1260
      %v1301 = vunpack.c.l.b16 %v1274
      %v1302 = vunpack.c.l.b16 %v1284
      %v1303 = vpack.c.b16 %v1288, %v1287
      %v1304 = vpack.c.b16 %v1290, %v1289
      %v1305 = vpack.c.b16 %v1292, %v1291
      %v1306 = vpack.c.b16 %v1294, %v1293
      %v1307 = vpack.c.b16 %v1296, %v1295
      %v1308 = vpack.c.b16 %v1298, %v1297
      %v1309 = vpack.c.b16 %v1300, %v1299
      %v1310 = vpack.c.b16 %v1302, %v1301
      %v1312 = vsel %vm523, %v1303, 0
      %v1315 = vsel %vm523, %v1304, 0
      %v1318 = vsel %vm523, %v1305, 0
      %v1321 = vsel %vm523, %v1306, 0
      %v1324 = vsel %vm523, %v1307, 0
      %v1327 = vsel %vm523, %v1308, 0
      %v1330 = vsel %vm523, %v1309, 0
      %v1333 = vsel %vm523, %v1310, 0
      %v1336 = vsel %vm548, %v1286, 0
      %1338 = vmatpush.bf16.msra.mxu0 0
      %1339 = vmatpush.bf16.msra.mxu0 0
      %1340 = vmatpush.bf16.msra.mxu0 0
      %1341 = vmatpush.bf16.msra.mxu0 0
      %1342 = vmatpush.bf16.msra.mxu0 0
      %1343 = vmatpush.bf16.msra.mxu0 0
      %1344 = vmatpush.bf16.msra.mxu0 0
      %1345 = vmatpush.bf16.msra.mxu0 %v1336
      %1346 = vmatmul.bf16.gmra.mxu0 %v1312
      %v1347 = vpop.f32.mrf.mxu0
      %v1348 = vadd.f32 0.0, %v1347
      %v1349 = vpop.f32.mrf.mxu0
      %v1350 = vadd.f32 0.0, %v1349
      %1351 = vmatmul.bf16.gmra.mxu0 %v1315
      %v1352 = vpop.f32.mrf.mxu0
      %v1353 = vadd.f32 0.0, %v1352
      %v1354 = vpop.f32.mrf.mxu0
      %v1355 = vadd.f32 0.0, %v1354
      %1356 = vmatmul.bf16.gmra.mxu0 %v1318
      %v1357 = vpop.f32.mrf.mxu0
      %v1358 = vadd.f32 0.0, %v1357
      %v1359 = vpop.f32.mrf.mxu0
      %v1360 = vadd.f32 0.0, %v1359
      %1361 = vmatmul.bf16.gmra.mxu0 %v1321
      %v1362 = vpop.f32.mrf.mxu0
      %v1363 = vadd.f32 0.0, %v1362
      %v1364 = vpop.f32.mrf.mxu0
      %v1365 = vadd.f32 0.0, %v1364
      %1366 = vmatmul.bf16.gmra.mxu0 %v1324
      %v1367 = vpop.f32.mrf.mxu0
      %v1368 = vadd.f32 0.0, %v1367
      %v1369 = vpop.f32.mrf.mxu0
      %v1370 = vadd.f32 0.0, %v1369
      %1371 = vmatmul.bf16.gmra.mxu0 %v1327
      %v1372 = vpop.f32.mrf.mxu0
      %v1373 = vadd.f32 0.0, %v1372
      %v1374 = vpop.f32.mrf.mxu0
      %v1375 = vadd.f32 0.0, %v1374
      %1376 = vmatmul.bf16.gmra.mxu0 %v1330
      %v1377 = vpop.f32.mrf.mxu0
      %v1378 = vadd.f32 0.0, %v1377
      %v1379 = vpop.f32.mrf.mxu0
      %v1380 = vadd.f32 0.0, %v1379
      %1381 = vmatmul.bf16.gmra.mxu0 %v1333
      %v1382 = vpop.f32.mrf.mxu0
      %v1383 = vadd.f32 0.0, %v1382
      %v1384 = vpop.f32.mrf.mxu0
      %v1385 = vadd.f32 0.0, %v1384
      %1386 = vdwg.mxu0
      %v1387 = vadd.f32 %v1053, %v1348
      %v1388 = vadd.f32 %v1054, %v1350
      %v1389 = vadd.f32 %v1055, %v1353
      %v1390 = vadd.f32 %v1056, %v1355
      %v1391 = vadd.f32 %v1057, %v1358
      %v1392 = vadd.f32 %v1058, %v1360
      %v1393 = vadd.f32 %v1059, %v1363
      %v1394 = vadd.f32 %v1060, %v1365
      %v1395 = vadd.f32 %v1061, %v1368
      %v1396 = vadd.f32 %v1062, %v1370
      %v1397 = vadd.f32 %v1063, %v1373
      %v1398 = vadd.f32 %v1064, %v1375
      %v1399 = vadd.f32 %v1065, %v1378
      %v1400 = vadd.f32 %v1066, %v1380
      %v1401 = vadd.f32 %v1067, %v1383
      %v1402 = vadd.f32 %v1068, %v1385
      %v1403 = vld [vmem:[%s918] sm:$0xe]
      %v1404 = vld [vmem:[%s918 + $0xc] sm:$0xe]
      %v1405 = vld [vmem:[%s918 + $0x18] sm:$0xe]
      %v1406 = vld [vmem:[%s918 + $0x24] sm:$0xe]
      %v1407 = vld [vmem:[%s918 + $0x30] sm:$0xe]
      %v1408 = vld [vmem:[%s918 + $0x3c] sm:$0xe]
      %v1409 = vld [vmem:[%s918 + $0x48] sm:$0xe]
      %v1410 = vld [vmem:[%s918 + $0x54] sm:$0xe]
      %v1435 = vrot.slane %v1403, 5
      %v1436 = vrot.slane %v1435, 4
      %v1437 = vrot.slane %v1070, 5
      %v1438 = vsel %vm743, %v1436, %v1437
      %v1439 = vrot.slane %v1437, 4
      %v1440 = vrot.slane %v1071, 5
      %v1441 = vsel %vm743, %v1439, %v1440
      %v1442 = vrot.slane %v1404, 5
      %v1443 = vrot.slane %v1442, 4
      %v1444 = vrot.slane %v1073, 5
      %v1445 = vsel %vm743, %v1443, %v1444
      %v1446 = vrot.slane %v1444, 4
      %v1447 = vrot.slane %v1074, 5
      %v1448 = vsel %vm743, %v1446, %v1447
      %v1449 = vrot.slane %v1405, 5
      %v1450 = vrot.slane %v1449, 4
      %v1451 = vrot.slane %v1076, 5
      %v1452 = vsel %vm743, %v1450, %v1451
      %v1453 = vrot.slane %v1451, 4
      %v1454 = vrot.slane %v1077, 5
      %v1455 = vsel %vm743, %v1453, %v1454
      %v1456 = vrot.slane %v1406, 5
      %v1457 = vrot.slane %v1456, 4
      %v1458 = vrot.slane %v1079, 5
      %v1459 = vsel %vm743, %v1457, %v1458
      %v1460 = vrot.slane %v1458, 4
      %v1461 = vrot.slane %v1080, 5
      %v1462 = vsel %vm743, %v1460, %v1461
      %v1463 = vrot.slane %v1407, 5
      %v1464 = vrot.slane %v1463, 4
      %v1465 = vrot.slane %v1082, 5
      %v1466 = vsel %vm743, %v1464, %v1465
      %v1467 = vrot.slane %v1465, 4
      %v1468 = vrot.slane %v1083, 5
      %v1469 = vsel %vm743, %v1467, %v1468
      %v1470 = vrot.slane %v1408, 5
      %v1471 = vrot.slane %v1470, 4
      %v1472 = vrot.slane %v1085, 5
      %v1473 = vsel %vm743, %v1471, %v1472
      %v1474 = vrot.slane %v1472, 4
      %v1475 = vrot.slane %v1086, 5
      %v1476 = vsel %vm743, %v1474, %v1475
      %v1477 = vrot.slane %v1409, 5
      %v1478 = vrot.slane %v1477, 4
      %v1479 = vrot.slane %v1088, 5
      %v1480 = vsel %vm743, %v1478, %v1479
      %v1481 = vrot.slane %v1479, 4
      %v1482 = vrot.slane %v1089, 5
      %v1483 = vsel %vm743, %v1481, %v1482
      %v1484 = vrot.slane %v1410, 5
      %v1485 = vrot.slane %v1484, 4
      %v1486 = vrot.slane %v1091, 5
      %v1487 = vsel %vm743, %v1485, %v1486
      %v1488 = vrot.slane %v1486, 4
      %v1489 = vrot.slane %v1092, 5
      %v1490 = vsel %vm743, %v1488, %v1489
      %s1491 = scalar_lea.vmem %s2, 10
      %v1492 = vld [vmem:[%s1491] sm:$0x3]
      %v1493 = vunpack.c.l.b16 %v1438
      %v1494 = vunpack.c.l.b16 %v1441
      %v1495 = vunpack.c.l.b16 %v1445
      %v1496 = vunpack.c.l.b16 %v1448
      %v1497 = vunpack.c.l.b16 %v1452
      %v1498 = vunpack.c.l.b16 %v1455
      %v1499 = vunpack.c.l.b16 %v1459
      %v1500 = vunpack.c.l.b16 %v1462
      %v1501 = vunpack.c.l.b16 %v1466
      %v1502 = vunpack.c.l.b16 %v1469
      %v1503 = vunpack.c.l.b16 %v1473
      %v1504 = vunpack.c.l.b16 %v1476
      %v1505 = vunpack.c.l.b16 %v1480
      %v1506 = vunpack.c.l.b16 %v1483
      %v1507 = vunpack.c.l.b16 %v1487
      %v1508 = vunpack.c.l.b16 %v1490
      %v1509 = vpack.c.b16 %v1494, %v1493
      %v1510 = vpack.c.b16 %v1496, %v1495
      %v1511 = vpack.c.b16 %v1498, %v1497
      %v1512 = vpack.c.b16 %v1500, %v1499
      %v1513 = vpack.c.b16 %v1502, %v1501
      %v1514 = vpack.c.b16 %v1504, %v1503
      %v1515 = vpack.c.b16 %v1506, %v1505
      %v1516 = vpack.c.b16 %v1508, %v1507
      %v1518 = vsel %vm523, %v1509, 0
      %v1521 = vsel %vm523, %v1510, 0
      %v1524 = vsel %vm523, %v1511, 0
      %v1527 = vsel %vm523, %v1512, 0
      %v1530 = vsel %vm523, %v1513, 0
      %v1533 = vsel %vm523, %v1514, 0
      %v1536 = vsel %vm523, %v1515, 0
      %v1539 = vsel %vm523, %v1516, 0
      %v1542 = vsel %vm548, %v1492, 0
      %1544 = vmatpush.bf16.msra.mxu0 0
      %1545 = vmatpush.bf16.msra.mxu0 0
      %1546 = vmatpush.bf16.msra.mxu0 0
      %1547 = vmatpush.bf16.msra.mxu0 0
      %1548 = vmatpush.bf16.msra.mxu0 0
      %1549 = vmatpush.bf16.msra.mxu0 0
      %1550 = vmatpush.bf16.msra.mxu0 0
      %1551 = vmatpush.bf16.msra.mxu0 %v1542
      %1552 = vmatmul.bf16.gmra.mxu0 %v1518
      %v1553 = vpop.f32.mrf.mxu0
      %v1554 = vadd.f32 0.0, %v1553
      %v1555 = vpop.f32.mrf.mxu0
      %v1556 = vadd.f32 0.0, %v1555
      %1557 = vmatmul.bf16.gmra.mxu0 %v1521
      %v1558 = vpop.f32.mrf.mxu0
      %v1559 = vadd.f32 0.0, %v1558
      %v1560 = vpop.f32.mrf.mxu0
      %v1561 = vadd.f32 0.0, %v1560
      %1562 = vmatmul.bf16.gmra.mxu0 %v1524
      %v1563 = vpop.f32.mrf.mxu0
      %v1564 = vadd.f32 0.0, %v1563
      %v1565 = vpop.f32.mrf.mxu0
      %v1566 = vadd.f32 0.0, %v1565
      %1567 = vmatmul.bf16.gmra.mxu0 %v1527
      %v1568 = vpop.f32.mrf.mxu0
      %v1569 = vadd.f32 0.0, %v1568
      %v1570 = vpop.f32.mrf.mxu0
      %v1571 = vadd.f32 0.0, %v1570
      %1572 = vmatmul.bf16.gmra.mxu0 %v1530
      %v1573 = vpop.f32.mrf.mxu0
      %v1574 = vadd.f32 0.0, %v1573
      %v1575 = vpop.f32.mrf.mxu0
      %v1576 = vadd.f32 0.0, %v1575
      %1577 = vmatmul.bf16.gmra.mxu0 %v1533
      %v1578 = vpop.f32.mrf.mxu0
      %v1579 = vadd.f32 0.0, %v1578
      %v1580 = vpop.f32.mrf.mxu0
      %v1581 = vadd.f32 0.0, %v1580
      %1582 = vmatmul.bf16.gmra.mxu0 %v1536
      %v1583 = vpop.f32.mrf.mxu0
      %v1584 = vadd.f32 0.0, %v1583
      %v1585 = vpop.f32.mrf.mxu0
      %v1586 = vadd.f32 0.0, %v1585
      %1587 = vmatmul.bf16.gmra.mxu0 %v1539
      %v1588 = vpop.f32.mrf.mxu0
      %v1589 = vadd.f32 0.0, %v1588
      %v1590 = vpop.f32.mrf.mxu0
      %v1591 = vadd.f32 0.0, %v1590
      %1592 = vdwg.mxu0
      %v1593 = vadd.f32 %v1387, %v1554
      %v1594 = vadd.f32 %v1388, %v1556
      %v1595 = vadd.f32 %v1389, %v1559
      %v1596 = vadd.f32 %v1390, %v1561
      %v1597 = vadd.f32 %v1391, %v1564
      %v1598 = vadd.f32 %v1392, %v1566
      %v1599 = vadd.f32 %v1393, %v1569
      %v1600 = vadd.f32 %v1394, %v1571
      %v1601 = vadd.f32 %v1395, %v1574
      %v1602 = vadd.f32 %v1396, %v1576
      %v1603 = vadd.f32 %v1397, %v1579
      %v1604 = vadd.f32 %v1398, %v1581
      %v1605 = vadd.f32 %v1399, %v1584
      %v1606 = vadd.f32 %v1400, %v1586
      %v1607 = vadd.f32 %v1401, %v1589
      %v1608 = vadd.f32 %v1402, %v1591
      %s1609 = scalar_lea.vmem %s253, 24
      %v1610 = vld [vmem:[%s1609] sm:$0xf]
      %v1611 = vld [vmem:[%s1609 + $0x4] sm:$0xf]
      %v1612 = vld [vmem:[%s1609 + $0xc] sm:$0xf]
      %v1613 = vld [vmem:[%s1609 + $0x10] sm:$0xf]
      %v1614 = vld [vmem:[%s1609 + $0x18] sm:$0xf]
      %v1615 = vld [vmem:[%s1609 + $0x1c] sm:$0xf]
      %v1616 = vld [vmem:[%s1609 + $0x24] sm:$0xf]
      %v1617 = vld [vmem:[%s1609 + $0x28] sm:$0xf]
      %v1618 = vld [vmem:[%s1609 + $0x30] sm:$0xf]
      %v1619 = vld [vmem:[%s1609 + $0x34] sm:$0xf]
      %v1620 = vld [vmem:[%s1609 + $0x3c] sm:$0xf]
      %v1621 = vld [vmem:[%s1609 + $0x40] sm:$0xf]
      %v1622 = vld [vmem:[%s1609 + $0x48] sm:$0xf]
      %v1623 = vld [vmem:[%s1609 + $0x4c] sm:$0xf]
      %v1624 = vld [vmem:[%s1609 + $0x54] sm:$0xf]
      %v1625 = vld [vmem:[%s1609 + $0x58] sm:$0xf]
      %s1626 = scalar_lea.vmem %s2, 12
      %v1627 = vld [vmem:[%s1626] sm:$0x3]
      %v1644 = vunpack.c.l.b16 %v1610
      %v1645 = vunpack.c.l.b16 %v1611
      %v1646 = vunpack.c.l.b16 %v1612
      %v1647 = vunpack.c.l.b16 %v1613
      %v1648 = vunpack.c.l.b16 %v1614
      %v1649 = vunpack.c.l.b16 %v1615
      %v1650 = vunpack.c.l.b16 %v1616
      %v1651 = vunpack.c.l.b16 %v1617
      %v1652 = vunpack.c.l.b16 %v1618
      %v1653 = vunpack.c.l.b16 %v1619
      %v1654 = vunpack.c.l.b16 %v1620
      %v1655 = vunpack.c.l.b16 %v1621
      %v1656 = vunpack.c.l.b16 %v1622
      %v1657 = vunpack.c.l.b16 %v1623
      %v1658 = vunpack.c.l.b16 %v1624
      %v1659 = vunpack.c.l.b16 %v1625
      %v1660 = vpack.c.b16 %v1645, %v1644
      %v1661 = vpack.c.b16 %v1647, %v1646
      %v1662 = vpack.c.b16 %v1649, %v1648
      %v1663 = vpack.c.b16 %v1651, %v1650
      %v1664 = vpack.c.b16 %v1653, %v1652
      %v1665 = vpack.c.b16 %v1655, %v1654
      %v1666 = vpack.c.b16 %v1657, %v1656
      %v1667 = vpack.c.b16 %v1659, %v1658
      %v1669 = vsel %vm523, %v1660, 0
      %v1672 = vsel %vm523, %v1661, 0
      %v1675 = vsel %vm523, %v1662, 0
      %v1678 = vsel %vm523, %v1663, 0
      %v1681 = vsel %vm523, %v1664, 0
      %v1684 = vsel %vm523, %v1665, 0
      %v1687 = vsel %vm523, %v1666, 0
      %v1690 = vsel %vm523, %v1667, 0
      %v1693 = vsel %vm548, %v1627, 0
      %1695 = vmatpush.bf16.msra.mxu0 0
      %1696 = vmatpush.bf16.msra.mxu0 0
      %1697 = vmatpush.bf16.msra.mxu0 0
      %1698 = vmatpush.bf16.msra.mxu0 0
      %1699 = vmatpush.bf16.msra.mxu0 0
      %1700 = vmatpush.bf16.msra.mxu0 0
      %1701 = vmatpush.bf16.msra.mxu0 0
      %1702 = vmatpush.bf16.msra.mxu0 %v1693
      %1703 = vmatmul.bf16.gmra.mxu0 %v1669
      %v1704 = vpop.f32.mrf.mxu0
      %v1705 = vadd.f32 0.0, %v1704
      %v1706 = vpop.f32.mrf.mxu0
      %v1707 = vadd.f32 0.0, %v1706
      %1708 = vmatmul.bf16.gmra.mxu0 %v1672
      %v1709 = vpop.f32.mrf.mxu0
      %v1710 = vadd.f32 0.0, %v1709
      %v1711 = vpop.f32.mrf.mxu0
      %v1712 = vadd.f32 0.0, %v1711
      %1713 = vmatmul.bf16.gmra.mxu0 %v1675
      %v1714 = vpop.f32.mrf.mxu0
      %v1715 = vadd.f32 0.0, %v1714
      %v1716 = vpop.f32.mrf.mxu0
      %v1717 = vadd.f32 0.0, %v1716
      %1718 = vmatmul.bf16.gmra.mxu0 %v1678
      %v1719 = vpop.f32.mrf.mxu0
      %v1720 = vadd.f32 0.0, %v1719
      %v1721 = vpop.f32.mrf.mxu0
      %v1722 = vadd.f32 0.0, %v1721
      %1723 = vmatmul.bf16.gmra.mxu0 %v1681
      %v1724 = vpop.f32.mrf.mxu0
      %v1725 = vadd.f32 0.0, %v1724
      %v1726 = vpop.f32.mrf.mxu0
      %v1727 = vadd.f32 0.0, %v1726
      %1728 = vmatmul.bf16.gmra.mxu0 %v1684
      %v1729 = vpop.f32.mrf.mxu0
      %v1730 = vadd.f32 0.0, %v1729
      %v1731 = vpop.f32.mrf.mxu0
      %v1732 = vadd.f32 0.0, %v1731
      %1733 = vmatmul.bf16.gmra.mxu0 %v1687
      %v1734 = vpop.f32.mrf.mxu0
      %v1735 = vadd.f32 0.0, %v1734
      %v1736 = vpop.f32.mrf.mxu0
      %v1737 = vadd.f32 0.0, %v1736
      %1738 = vmatmul.bf16.gmra.mxu0 %v1690
      %v1739 = vpop.f32.mrf.mxu0
      %v1740 = vadd.f32 0.0, %v1739
      %v1741 = vpop.f32.mrf.mxu0
      %v1742 = vadd.f32 0.0, %v1741
      %1743 = vdwg.mxu0
      %v1744 = vadd.f32 %v1593, %v1705
      %v1745 = vadd.f32 %v1594, %v1707
      %v1746 = vadd.f32 %v1595, %v1710
      %v1747 = vadd.f32 %v1596, %v1712
      %v1748 = vadd.f32 %v1597, %v1715
      %v1749 = vadd.f32 %v1598, %v1717
      %v1750 = vadd.f32 %v1599, %v1720
      %v1751 = vadd.f32 %v1600, %v1722
      %v1752 = vadd.f32 %v1601, %v1725
      %v1753 = vadd.f32 %v1602, %v1727
      %v1754 = vadd.f32 %v1603, %v1730
      %v1755 = vadd.f32 %v1604, %v1732
      %v1756 = vadd.f32 %v1605, %v1735
      %v1757 = vadd.f32 %v1606, %v1737
      %v1758 = vadd.f32 %v1607, %v1740
      %v1759 = vadd.f32 %v1608, %v1742
      %v1760 = vld [vmem:[%s1609] sm:$0xf]
      %v1761 = vld [vmem:[%s1609 + $0x4] sm:$0xf]
      %v1762 = vld [vmem:[%s1609 + $0x8] sm:$0x1]
      %v1763 = vld [vmem:[%s1609 + $0xc] sm:$0xf]
      %v1764 = vld [vmem:[%s1609 + $0x10] sm:$0xf]
      %v1765 = vld [vmem:[%s1609 + $0x14] sm:$0x1]
      %v1766 = vld [vmem:[%s1609 + $0x18] sm:$0xf]
      %v1767 = vld [vmem:[%s1609 + $0x1c] sm:$0xf]
      %v1768 = vld [vmem:[%s1609 + $0x20] sm:$0x1]
      %v1769 = vld [vmem:[%s1609 + $0x24] sm:$0xf]
      %v1770 = vld [vmem:[%s1609 + $0x28] sm:$0xf]
      %v1771 = vld [vmem:[%s1609 + $0x2c] sm:$0x1]
      %v1772 = vld [vmem:[%s1609 + $0x30] sm:$0xf]
      %v1773 = vld [vmem:[%s1609 + $0x34] sm:$0xf]
      %v1774 = vld [vmem:[%s1609 + $0x38] sm:$0x1]
      %v1775 = vld [vmem:[%s1609 + $0x3c] sm:$0xf]
      %v1776 = vld [vmem:[%s1609 + $0x40] sm:$0xf]
      %v1777 = vld [vmem:[%s1609 + $0x44] sm:$0x1]
      %v1778 = vld [vmem:[%s1609 + $0x48] sm:$0xf]
      %v1779 = vld [vmem:[%s1609 + $0x4c] sm:$0xf]
      %v1780 = vld [vmem:[%s1609 + $0x50] sm:$0x1]
      %v1781 = vld [vmem:[%s1609 + $0x54] sm:$0xf]
      %v1782 = vld [vmem:[%s1609 + $0x58] sm:$0xf]
      %v1783 = vld [vmem:[%s1609 + $0x5c] sm:$0x1]
      %v1785 = vshrl.u32 %v1760, 16
      %v1787 = vrot.slane %v1785, 4
      %v1788 = vshll.u32 %v1760, 16
      %v1790 = vrot.slane %v1788, 5
      %v1791 = vor.u32 %v1787, %v1790
      %v1792 = vrot.slane %v1791, 4
      %v1794 = vshll.u32 %v1761, 16
      %v1796 = vrot.slane %v1794, 5
      %v1797 = vsel %vm304, %v1792, %v1796
      %v1798 = vshrl.u32 %v1761, 16
      %v1800 = vrot.slane %v1798, 4
      %v1801 = vor.u32 %v1800, %v1796
      %v1802 = vrot.slane %v1801, 4
      %v1804 = vshll.u32 %v1762, 16
      %v1806 = vrot.slane %v1804, 5
      %v1807 = vsel %vm304, %v1802, %v1806
      %v1809 = vshrl.u32 %v1763, 16
      %v1811 = vrot.slane %v1809, 4
      %v1812 = vshll.u32 %v1763, 16
      %v1814 = vrot.slane %v1812, 5
      %v1815 = vor.u32 %v1811, %v1814
      %v1816 = vrot.slane %v1815, 4
      %v1818 = vshll.u32 %v1764, 16
      %v1820 = vrot.slane %v1818, 5
      %v1821 = vsel %vm304, %v1816, %v1820
      %v1822 = vshrl.u32 %v1764, 16
      %v1824 = vrot.slane %v1822, 4
      %v1825 = vor.u32 %v1824, %v1820
      %v1826 = vrot.slane %v1825, 4
      %v1828 = vshll.u32 %v1765, 16
      %v1830 = vrot.slane %v1828, 5
      %v1831 = vsel %vm304, %v1826, %v1830
      %v1833 = vshrl.u32 %v1766, 16
      %v1835 = vrot.slane %v1833, 4
      %v1836 = vshll.u32 %v1766, 16
      %v1838 = vrot.slane %v1836, 5
      %v1839 = vor.u32 %v1835, %v1838
      %v1840 = vrot.slane %v1839, 4
      %v1842 = vshll.u32 %v1767, 16
      %v1844 = vrot.slane %v1842, 5
      %v1845 = vsel %vm304, %v1840, %v1844
      %v1846 = vshrl.u32 %v1767, 16
      %v1848 = vrot.slane %v1846, 4
      %v1849 = vor.u32 %v1848, %v1844
      %v1850 = vrot.slane %v1849, 4
      %v1852 = vshll.u32 %v1768, 16
      %v1854 = vrot.slane %v1852, 5
      %v1855 = vsel %vm304, %v1850, %v1854
      %v1857 = vshrl.u32 %v1769, 16
      %v1859 = vrot.slane %v1857, 4
      %v1860 = vshll.u32 %v1769, 16
      %v1862 = vrot.slane %v1860, 5
      %v1863 = vor.u32 %v1859, %v1862
      %v1864 = vrot.slane %v1863, 4
      %v1866 = vshll.u32 %v1770, 16
      %v1868 = vrot.slane %v1866, 5
      %v1869 = vsel %vm304, %v1864, %v1868
      %v1870 = vshrl.u32 %v1770, 16
      %v1872 = vrot.slane %v1870, 4
      %v1873 = vor.u32 %v1872, %v1868
      %v1874 = vrot.slane %v1873, 4
      %v1876 = vshll.u32 %v1771, 16
      %v1878 = vrot.slane %v1876, 5
      %v1879 = vsel %vm304, %v1874, %v1878
      %v1881 = vshrl.u32 %v1772, 16
      %v1883 = vrot.slane %v1881, 4
      %v1884 = vshll.u32 %v1772, 16
      %v1886 = vrot.slane %v1884, 5
      %v1887 = vor.u32 %v1883, %v1886
      %v1888 = vrot.slane %v1887, 4
      %v1890 = vshll.u32 %v1773, 16
      %v1892 = vrot.slane %v1890, 5
      %v1893 = vsel %vm304, %v1888, %v1892
      %v1894 = vshrl.u32 %v1773, 16
      %v1896 = vrot.slane %v1894, 4
      %v1897 = vor.u32 %v1896, %v1892
      %v1898 = vrot.slane %v1897, 4
      %v1900 = vshll.u32 %v1774, 16
      %v1902 = vrot.slane %v1900, 5
      %v1903 = vsel %vm304, %v1898, %v1902
      %v1905 = vshrl.u32 %v1775, 16
      %v1907 = vrot.slane %v1905, 4
      %v1908 = vshll.u32 %v1775, 16
      %v1910 = vrot.slane %v1908, 5
      %v1911 = vor.u32 %v1907, %v1910
      %v1912 = vrot.slane %v1911, 4
      %v1914 = vshll.u32 %v1776, 16
      %v1916 = vrot.slane %v1914, 5
      %v1917 = vsel %vm304, %v1912, %v1916
      %v1918 = vshrl.u32 %v1776, 16
      %v1920 = vrot.slane %v1918, 4
      %v1921 = vor.u32 %v1920, %v1916
      %v1922 = vrot.slane %v1921, 4
      %v1924 = vshll.u32 %v1777, 16
      %v1926 = vrot.slane %v1924, 5
      %v1927 = vsel %vm304, %v1922, %v1926
      %v1929 = vshrl.u32 %v1778, 16
      %v1931 = vrot.slane %v1929, 4
      %v1932 = vshll.u32 %v1778, 16
      %v1934 = vrot.slane %v1932, 5
      %v1935 = vor.u32 %v1931, %v1934
      %v1936 = vrot.slane %v1935, 4
      %v1938 = vshll.u32 %v1779, 16
      %v1940 = vrot.slane %v1938, 5
      %v1941 = vsel %vm304, %v1936, %v1940
      %v1942 = vshrl.u32 %v1779, 16
      %v1944 = vrot.slane %v1942, 4
      %v1945 = vor.u32 %v1944, %v1940
      %v1946 = vrot.slane %v1945, 4
      %v1948 = vshll.u32 %v1780, 16
      %v1950 = vrot.slane %v1948, 5
      %v1951 = vsel %vm304, %v1946, %v1950
      %v1953 = vshrl.u32 %v1781, 16
      %v1955 = vrot.slane %v1953, 4
      %v1956 = vshll.u32 %v1781, 16
      %v1958 = vrot.slane %v1956, 5
      %v1959 = vor.u32 %v1955, %v1958
      %v1960 = vrot.slane %v1959, 4
      %v1962 = vshll.u32 %v1782, 16
      %v1964 = vrot.slane %v1962, 5
      %v1965 = vsel %vm304, %v1960, %v1964
      %v1966 = vshrl.u32 %v1782, 16
      %v1968 = vrot.slane %v1966, 4
      %v1969 = vor.u32 %v1968, %v1964
      %v1970 = vrot.slane %v1969, 4
      %v1972 = vshll.u32 %v1783, 16
      %v1974 = vrot.slane %v1972, 5
      %v1975 = vsel %vm304, %v1970, %v1974
      %s1976 = scalar_lea.vmem %s2, 14
      %v1977 = vld [vmem:[%s1976] sm:$0x3]
      %v1978 = vunpack.c.l.b16 %v1797
      %v1979 = vunpack.c.l.b16 %v1807
      %v1980 = vunpack.c.l.b16 %v1821
      %v1981 = vunpack.c.l.b16 %v1831
      %v1982 = vunpack.c.l.b16 %v1845
      %v1983 = vunpack.c.l.b16 %v1855
      %v1984 = vunpack.c.l.b16 %v1869
      %v1985 = vunpack.c.l.b16 %v1879
      %v1986 = vunpack.c.l.b16 %v1893
      %v1987 = vunpack.c.l.b16 %v1903
      %v1988 = vunpack.c.l.b16 %v1917
      %v1989 = vunpack.c.l.b16 %v1927
      %v1990 = vunpack.c.l.b16 %v1941
      %v1991 = vunpack.c.l.b16 %v1951
      %v1992 = vunpack.c.l.b16 %v1965
      %v1993 = vunpack.c.l.b16 %v1975
      %v1994 = vpack.c.b16 %v1979, %v1978
      %v1995 = vpack.c.b16 %v1981, %v1980
      %v1996 = vpack.c.b16 %v1983, %v1982
      %v1997 = vpack.c.b16 %v1985, %v1984
      %v1998 = vpack.c.b16 %v1987, %v1986
      %v1999 = vpack.c.b16 %v1989, %v1988
      %v2000 = vpack.c.b16 %v1991, %v1990
      %v2001 = vpack.c.b16 %v1993, %v1992
      %v2003 = vsel %vm523, %v1994, 0
      %v2006 = vsel %vm523, %v1995, 0
      %v2009 = vsel %vm523, %v1996, 0
      %v2012 = vsel %vm523, %v1997, 0
      %v2015 = vsel %vm523, %v1998, 0
      %v2018 = vsel %vm523, %v1999, 0
      %v2021 = vsel %vm523, %v2000, 0
      %v2024 = vsel %vm523, %v2001, 0
      %v2027 = vsel %vm548, %v1977, 0
      %2029 = vmatpush.bf16.msra.mxu0 0
      %2030 = vmatpush.bf16.msra.mxu0 0
      %2031 = vmatpush.bf16.msra.mxu0 0
      %2032 = vmatpush.bf16.msra.mxu0 0
      %2033 = vmatpush.bf16.msra.mxu0 0
      %2034 = vmatpush.bf16.msra.mxu0 0
      %2035 = vmatpush.bf16.msra.mxu0 0
      %2036 = vmatpush.bf16.msra.mxu0 %v2027
      %2037 = vmatmul.bf16.gmra.mxu0 %v2003
      %v2038 = vpop.f32.mrf.mxu0
      %v2039 = vadd.f32 0.0, %v2038
      %v2040 = vpop.f32.mrf.mxu0
      %v2041 = vadd.f32 0.0, %v2040
      %2042 = vmatmul.bf16.gmra.mxu0 %v2006
      %v2043 = vpop.f32.mrf.mxu0
      %v2044 = vadd.f32 0.0, %v2043
      %v2045 = vpop.f32.mrf.mxu0
      %v2046 = vadd.f32 0.0, %v2045
      %2047 = vmatmul.bf16.gmra.mxu0 %v2009
      %v2048 = vpop.f32.mrf.mxu0
      %v2049 = vadd.f32 0.0, %v2048
      %v2050 = vpop.f32.mrf.mxu0
      %v2051 = vadd.f32 0.0, %v2050
      %2052 = vmatmul.bf16.gmra.mxu0 %v2012
      %v2053 = vpop.f32.mrf.mxu0
      %v2054 = vadd.f32 0.0, %v2053
      %v2055 = vpop.f32.mrf.mxu0
      %v2056 = vadd.f32 0.0, %v2055
      %2057 = vmatmul.bf16.gmra.mxu0 %v2015
      %v2058 = vpop.f32.mrf.mxu0
      %v2059 = vadd.f32 0.0, %v2058
      %v2060 = vpop.f32.mrf.mxu0
      %v2061 = vadd.f32 0.0, %v2060
      %2062 = vmatmul.bf16.gmra.mxu0 %v2018
      %v2063 = vpop.f32.mrf.mxu0
      %v2064 = vadd.f32 0.0, %v2063
      %v2065 = vpop.f32.mrf.mxu0
      %v2066 = vadd.f32 0.0, %v2065
      %2067 = vmatmul.bf16.gmra.mxu0 %v2021
      %v2068 = vpop.f32.mrf.mxu0
      %v2069 = vadd.f32 0.0, %v2068
      %v2070 = vpop.f32.mrf.mxu0
      %v2071 = vadd.f32 0.0, %v2070
      %2072 = vmatmul.bf16.gmra.mxu0 %v2024
      %v2073 = vpop.f32.mrf.mxu0
      %v2074 = vadd.f32 0.0, %v2073
      %v2075 = vpop.f32.mrf.mxu0
      %v2076 = vadd.f32 0.0, %v2075
      %2077 = vdwg.mxu0
      %v2078 = vadd.f32 %v1744, %v2039
      %v2079 = vadd.f32 %v1745, %v2041
      %v2080 = vadd.f32 %v1746, %v2044
      %v2081 = vadd.f32 %v1747, %v2046
      %v2082 = vadd.f32 %v1748, %v2049
      %v2083 = vadd.f32 %v1749, %v2051
      %v2084 = vadd.f32 %v1750, %v2054
      %v2085 = vadd.f32 %v1751, %v2056
      %v2086 = vadd.f32 %v1752, %v2059
      %v2087 = vadd.f32 %v1753, %v2061
      %v2088 = vadd.f32 %v1754, %v2064
      %v2089 = vadd.f32 %v1755, %v2066
      %v2090 = vadd.f32 %v1756, %v2069
      %v2091 = vadd.f32 %v1757, %v2071
      %v2092 = vadd.f32 %v1758, %v2074
      %v2093 = vadd.f32 %v1759, %v2076
      %v2094 = vld [vmem:[%s1609] sm:$0xe]
      %v2095 = vld [vmem:[%s1609 + $0xc] sm:$0xe]
      %v2096 = vld [vmem:[%s1609 + $0x18] sm:$0xe]
      %v2097 = vld [vmem:[%s1609 + $0x24] sm:$0xe]
      %v2098 = vld [vmem:[%s1609 + $0x30] sm:$0xe]
      %v2099 = vld [vmem:[%s1609 + $0x3c] sm:$0xe]
      %v2100 = vld [vmem:[%s1609 + $0x48] sm:$0xe]
      %v2101 = vld [vmem:[%s1609 + $0x54] sm:$0xe]
      %v2126 = vrot.slane %v2094, 5
      %v2127 = vrot.slane %v2126, 4
      %v2128 = vrot.slane %v1761, 5
      %v2129 = vsel %vm743, %v2127, %v2128
      %v2130 = vrot.slane %v2128, 4
      %v2131 = vrot.slane %v1762, 5
      %v2132 = vsel %vm743, %v2130, %v2131
      %v2133 = vrot.slane %v2095, 5
      %v2134 = vrot.slane %v2133, 4
      %v2135 = vrot.slane %v1764, 5
      %v2136 = vsel %vm743, %v2134, %v2135
      %v2137 = vrot.slane %v2135, 4
      %v2138 = vrot.slane %v1765, 5
      %v2139 = vsel %vm743, %v2137, %v2138
      %v2140 = vrot.slane %v2096, 5
      %v2141 = vrot.slane %v2140, 4
      %v2142 = vrot.slane %v1767, 5
      %v2143 = vsel %vm743, %v2141, %v2142
      %v2144 = vrot.slane %v2142, 4
      %v2145 = vrot.slane %v1768, 5
      %v2146 = vsel %vm743, %v2144, %v2145
      %v2147 = vrot.slane %v2097, 5
      %v2148 = vrot.slane %v2147, 4
      %v2149 = vrot.slane %v1770, 5
      %v2150 = vsel %vm743, %v2148, %v2149
      %v2151 = vrot.slane %v2149, 4
      %v2152 = vrot.slane %v1771, 5
      %v2153 = vsel %vm743, %v2151, %v2152
      %v2154 = vrot.slane %v2098, 5
      %v2155 = vrot.slane %v2154, 4
      %v2156 = vrot.slane %v1773, 5
      %v2157 = vsel %vm743, %v2155, %v2156
      %v2158 = vrot.slane %v2156, 4
      %v2159 = vrot.slane %v1774, 5
      %v2160 = vsel %vm743, %v2158, %v2159
      %v2161 = vrot.slane %v2099, 5
      %v2162 = vrot.slane %v2161, 4
      %v2163 = vrot.slane %v1776, 5
      %v2164 = vsel %vm743, %v2162, %v2163
      %v2165 = vrot.slane %v2163, 4
      %v2166 = vrot.slane %v1777, 5
      %v2167 = vsel %vm743, %v2165, %v2166
      %v2168 = vrot.slane %v2100, 5
      %v2169 = vrot.slane %v2168, 4
      %v2170 = vrot.slane %v1779, 5
      %v2171 = vsel %vm743, %v2169, %v2170
      %v2172 = vrot.slane %v2170, 4
      %v2173 = vrot.slane %v1780, 5
      %v2174 = vsel %vm743, %v2172, %v2173
      %v2175 = vrot.slane %v2101, 5
      %v2176 = vrot.slane %v2175, 4
      %v2177 = vrot.slane %v1782, 5
      %v2178 = vsel %vm743, %v2176, %v2177
      %v2179 = vrot.slane %v2177, 4
      %v2180 = vrot.slane %v1783, 5
      %v2181 = vsel %vm743, %v2179, %v2180
      %s2182 = scalar_lea.vmem %s2, 16
      %v2183 = vld [vmem:[%s2182] sm:$0x3]
      %v2184 = vunpack.c.l.b16 %v2129
      %v2185 = vunpack.c.l.b16 %v2132
      %v2186 = vunpack.c.l.b16 %v2136
      %v2187 = vunpack.c.l.b16 %v2139
      %v2188 = vunpack.c.l.b16 %v2143
      %v2189 = vunpack.c.l.b16 %v2146
      %v2190 = vunpack.c.l.b16 %v2150
      %v2191 = vunpack.c.l.b16 %v2153
      %v2192 = vunpack.c.l.b16 %v2157
      %v2193 = vunpack.c.l.b16 %v2160
      %v2194 = vunpack.c.l.b16 %v2164
      %v2195 = vunpack.c.l.b16 %v2167
      %v2196 = vunpack.c.l.b16 %v2171
      %v2197 = vunpack.c.l.b16 %v2174
      %v2198 = vunpack.c.l.b16 %v2178
      %v2199 = vunpack.c.l.b16 %v2181
      %v2200 = vpack.c.b16 %v2185, %v2184
      %v2201 = vpack.c.b16 %v2187, %v2186
      %v2202 = vpack.c.b16 %v2189, %v2188
      %v2203 = vpack.c.b16 %v2191, %v2190
      %v2204 = vpack.c.b16 %v2193, %v2192
      %v2205 = vpack.c.b16 %v2195, %v2194
      %v2206 = vpack.c.b16 %v2197, %v2196
      %v2207 = vpack.c.b16 %v2199, %v2198
      %v2209 = vsel %vm523, %v2200, 0
      %v2212 = vsel %vm523, %v2201, 0
      %v2215 = vsel %vm523, %v2202, 0
      %v2218 = vsel %vm523, %v2203, 0
      %v2221 = vsel %vm523, %v2204, 0
      %v2224 = vsel %vm523, %v2205, 0
      %v2227 = vsel %vm523, %v2206, 0
      %v2230 = vsel %vm523, %v2207, 0
      %v2233 = vsel %vm548, %v2183, 0
      %2235 = vmatpush.bf16.msra.mxu0 0
      %2236 = vmatpush.bf16.msra.mxu0 0
      %2237 = vmatpush.bf16.msra.mxu0 0
      %2238 = vmatpush.bf16.msra.mxu0 0
      %2239 = vmatpush.bf16.msra.mxu0 0
      %2240 = vmatpush.bf16.msra.mxu0 0
      %2241 = vmatpush.bf16.msra.mxu0 0
      %2242 = vmatpush.bf16.msra.mxu0 %v2233
      %2243 = vmatmul.bf16.gmra.mxu0 %v2209
      %v2244 = vpop.f32.mrf.mxu0
      %v2245 = vadd.f32 0.0, %v2244
      %v2246 = vpop.f32.mrf.mxu0
      %v2247 = vadd.f32 0.0, %v2246
      %2248 = vmatmul.bf16.gmra.mxu0 %v2212
      %v2249 = vpop.f32.mrf.mxu0
      %v2250 = vadd.f32 0.0, %v2249
      %v2251 = vpop.f32.mrf.mxu0
      %v2252 = vadd.f32 0.0, %v2251
      %2253 = vmatmul.bf16.gmra.mxu0 %v2215
      %v2254 = vpop.f32.mrf.mxu0
      %v2255 = vadd.f32 0.0, %v2254
      %v2256 = vpop.f32.mrf.mxu0
      %v2257 = vadd.f32 0.0, %v2256
      %2258 = vmatmul.bf16.gmra.mxu0 %v2218
      %v2259 = vpop.f32.mrf.mxu0
      %v2260 = vadd.f32 0.0, %v2259
      %v2261 = vpop.f32.mrf.mxu0
      %v2262 = vadd.f32 0.0, %v2261
      %2263 = vmatmul.bf16.gmra.mxu0 %v2221
      %v2264 = vpop.f32.mrf.mxu0
      %v2265 = vadd.f32 0.0, %v2264
      %v2266 = vpop.f32.mrf.mxu0
      %v2267 = vadd.f32 0.0, %v2266
      %2268 = vmatmul.bf16.gmra.mxu0 %v2224
      %v2269 = vpop.f32.mrf.mxu0
      %v2270 = vadd.f32 0.0, %v2269
      %v2271 = vpop.f32.mrf.mxu0
      %v2272 = vadd.f32 0.0, %v2271
      %2273 = vmatmul.bf16.gmra.mxu0 %v2227
      %v2274 = vpop.f32.mrf.mxu0
      %v2275 = vadd.f32 0.0, %v2274
      %v2276 = vpop.f32.mrf.mxu0
      %v2277 = vadd.f32 0.0, %v2276
      %2278 = vmatmul.bf16.gmra.mxu0 %v2230
      %v2279 = vpop.f32.mrf.mxu0
      %v2280 = vadd.f32 0.0, %v2279
      %v2281 = vpop.f32.mrf.mxu0
      %v2282 = vadd.f32 0.0, %v2281
      %2283 = vdwg.mxu0
      %v2284 = vadd.f32 %v2078, %v2245
      %v2285 = vadd.f32 %v2079, %v2247
      %v2286 = vadd.f32 %v2080, %v2250
      %v2287 = vadd.f32 %v2081, %v2252
      %v2288 = vadd.f32 %v2082, %v2255
      %v2289 = vadd.f32 %v2083, %v2257
      %v2290 = vadd.f32 %v2084, %v2260
      %v2291 = vadd.f32 %v2085, %v2262
      %v2292 = vadd.f32 %v2086, %v2265
      %v2293 = vadd.f32 %v2087, %v2267
      %v2294 = vadd.f32 %v2088, %v2270
      %v2295 = vadd.f32 %v2089, %v2272
      %v2296 = vadd.f32 %v2090, %v2275
      %v2297 = vadd.f32 %v2091, %v2277
      %v2298 = vadd.f32 %v2092, %v2280
      %v2299 = vadd.f32 %v2093, %v2282
      %v2300 = vld [vmem:[%s3] sm:$0x1]
      %v2302 = vperm.slane %v2300, 0
      %v2304 = vadd.f32 %v2284, %v2302
      %v2305 = vadd.f32 %v2285, %v2302
      %v2306 = vadd.f32 %v2286, %v2302
      %v2307 = vadd.f32 %v2287, %v2302
      %v2308 = vadd.f32 %v2288, %v2302
      %v2309 = vadd.f32 %v2289, %v2302
      %v2310 = vadd.f32 %v2290, %v2302
      %v2311 = vadd.f32 %v2291, %v2302
      %v2312 = vadd.f32 %v2292, %v2302
      %v2313 = vadd.f32 %v2293, %v2302
      %v2314 = vadd.f32 %v2294, %v2302
      %v2315 = vadd.f32 %v2295, %v2302
      %v2316 = vadd.f32 %v2296, %v2302
      %v2317 = vadd.f32 %v2297, %v2302
      %v2318 = vadd.f32 %v2298, %v2302
      %v2319 = vadd.f32 %v2299, %v2302
      %v2320 = vmax.f32 %v2304, 0.0
      %v2321 = vmax.f32 %v2305, 0.0
      %v2322 = vmax.f32 %v2306, 0.0
      %v2323 = vmax.f32 %v2307, 0.0
      %v2324 = vmax.f32 %v2308, 0.0
      %v2325 = vmax.f32 %v2309, 0.0
      %v2326 = vmax.f32 %v2310, 0.0
      %v2327 = vmax.f32 %v2311, 0.0
      %v2328 = vmax.f32 %v2312, 0.0
      %v2329 = vmax.f32 %v2313, 0.0
      %v2330 = vmax.f32 %v2314, 0.0
      %v2331 = vmax.f32 %v2315, 0.0
      %v2332 = vmax.f32 %v2316, 0.0
      %v2333 = vmax.f32 %v2317, 0.0
      %v2334 = vmax.f32 %v2318, 0.0
      %v2335 = vmax.f32 %v2319, 0.0
      %v2336 = vld [vmem:[%s263] sm:$0xff]
      %v2337 = vld [vmem:[%s263 + $0x8] sm:$0xff]
      %v2338 = vld [vmem:[%s263 + $0x10] sm:$0xff]
      %v2339 = vld [vmem:[%s263 + $0x18] sm:$0xff]
      %v2340 = vld [vmem:[%s263 + $0x20] sm:$0xff]
      %v2341 = vld [vmem:[%s263 + $0x28] sm:$0xff]
      %v2342 = vld [vmem:[%s263 + $0x30] sm:$0xff]
      %v2343 = vld [vmem:[%s263 + $0x38] sm:$0xff]
      %v2344 = vld [vmem:[%s263 + $0x40] sm:$0xff]
      %v2345 = vld [vmem:[%s263 + $0x48] sm:$0xff]
      %v2346 = vld [vmem:[%s263 + $0x50] sm:$0xff]
      %v2347 = vld [vmem:[%s263 + $0x58] sm:$0xff]
      %v2348 = vld [vmem:[%s263 + $0x60] sm:$0xff]
      %v2349 = vld [vmem:[%s263 + $0x68] sm:$0xff]
      %v2350 = vld [vmem:[%s263 + $0x70] sm:$0xff]
      %v2351 = vld [vmem:[%s263 + $0x78] sm:$0xff]
      %2368 = vrot.lane.b32.xlu0 %v2320, 4
      %v2369 = vpop.permute.xlu0 %2368
      %2370 = vrot.lane.b32.xlu0 %v2321, 4
      %v2371 = vpop.permute.xlu0 %2370
      %2372 = vrot.lane.b32.xlu0 %v2322, 4
      %v2373 = vpop.permute.xlu0 %2372
      %2374 = vrot.lane.b32.xlu0 %v2323, 4
      %v2375 = vpop.permute.xlu0 %2374
      %2376 = vrot.lane.b32.xlu0 %v2324, 4
      %v2377 = vpop.permute.xlu0 %2376
      %2378 = vrot.lane.b32.xlu0 %v2325, 4
      %v2379 = vpop.permute.xlu0 %2378
      %2380 = vrot.lane.b32.xlu0 %v2326, 4
      %v2381 = vpop.permute.xlu0 %2380
      %2382 = vrot.lane.b32.xlu0 %v2327, 4
      %v2383 = vpop.permute.xlu0 %2382
      %2384 = vrot.lane.b32.xlu0 %v2328, 4
      %v2385 = vpop.permute.xlu0 %2384
      %2386 = vrot.lane.b32.xlu0 %v2329, 4
      %v2387 = vpop.permute.xlu0 %2386
      %2388 = vrot.lane.b32.xlu0 %v2330, 4
      %v2389 = vpop.permute.xlu0 %2388
      %2390 = vrot.lane.b32.xlu0 %v2331, 4
      %v2391 = vpop.permute.xlu0 %2390
      %2392 = vrot.lane.b32.xlu0 %v2332, 4
      %v2393 = vpop.permute.xlu0 %2392
      %2394 = vrot.lane.b32.xlu0 %v2333, 4
      %v2395 = vpop.permute.xlu0 %2394
      %2396 = vrot.lane.b32.xlu0 %v2334, 4
      %v2397 = vpop.permute.xlu0 %2396
      %2398 = vrot.lane.b32.xlu0 %v2335, 4
      %v2399 = vpop.permute.xlu0 %2398
      %v2416 = vsel %vm523, %v2336, %v2369
      %v2417 = vsel %vm523, %v2337, %v2371
      %v2418 = vsel %vm523, %v2338, %v2373
      %v2419 = vsel %vm523, %v2339, %v2375
      %v2420 = vsel %vm523, %v2340, %v2377
      %v2421 = vsel %vm523, %v2341, %v2379
      %v2422 = vsel %vm523, %v2342, %v2381
      %v2423 = vsel %vm523, %v2343, %v2383
      %v2424 = vsel %vm523, %v2344, %v2385
      %v2425 = vsel %vm523, %v2345, %v2387
      %v2426 = vsel %vm523, %v2346, %v2389
      %v2427 = vsel %vm523, %v2347, %v2391
      %v2428 = vsel %vm523, %v2348, %v2393
      %v2429 = vsel %vm523, %v2349, %v2395
      %v2430 = vsel %vm523, %v2350, %v2397
      %v2431 = vsel %vm523, %v2351, %v2399
      %vm2432 = vcmask 97280
      %2433 = vst.msk [vmem:[%s274] sm:$0xff] %vm2432, %v2416
      %2434 = vst.msk [vmem:[%s274 + $0x8] sm:$0xff] %vm2432, %v2417
      %2435 = vst.msk [vmem:[%s274 + $0x10] sm:$0xff] %vm2432, %v2418
      %2436 = vst.msk [vmem:[%s274 + $0x18] sm:$0xff] %vm2432, %v2419
      %2437 = vst.msk [vmem:[%s274 + $0x20] sm:$0xff] %vm2432, %v2420
      %2438 = vst.msk [vmem:[%s274 + $0x28] sm:$0xff] %vm2432, %v2421
      %2439 = vst.msk [vmem:[%s274 + $0x30] sm:$0xff] %vm2432, %v2422
      %2440 = vst.msk [vmem:[%s274 + $0x38] sm:$0xff] %vm2432, %v2423
      %2441 = vst.msk [vmem:[%s274 + $0x40] sm:$0xff] %vm2432, %v2424
      %2442 = vst.msk [vmem:[%s274 + $0x48] sm:$0xff] %vm2432, %v2425
      %2443 = vst.msk [vmem:[%s274 + $0x50] sm:$0xff] %vm2432, %v2426
      %2444 = vst.msk [vmem:[%s274 + $0x58] sm:$0xff] %vm2432, %v2427
      %2445 = vst.msk [vmem:[%s274 + $0x60] sm:$0xff] %vm2432, %v2428
      %2446 = vst.msk [vmem:[%s274 + $0x68] sm:$0xff] %vm2432, %v2429
      %2447 = vst.msk [vmem:[%s274 + $0x70] sm:$0xff] %vm2432, %v2430
      %2448 = vst.msk [vmem:[%s274 + $0x78] sm:$0xff] %vm2432, %v2431
      %s2449 = smul.u32 8, %s20
      %p2450 = scmp.lt.s32.totalorder %s19, 1
      %s2451 = scalar_select %p2450, %s19, 1
      %p2452 = scmp.lt.s32.totalorder %s2449, 15
      %s2453 = scalar_select %p2452, %s2449, 15
      %s2454 = smul.addr %s2453, 2
      %s2455 = smul.addr %s2451, 32
      %s2456 = sadd.s32 %s2454, %s2455
      %s2457 = smul.addr %s2456, 8
      %s2458 = scalar_lea.vmem %s4, %s2457
      // Predicated region
      $region37: #{rdb_conv_forward.1} parent=35 // pred_check
        %p2459 = pneg %p145
      $region38: #{rdb_conv_forward.1} parent=35 // pred_check_branch
        %2461 = sbr.rel (%p2459) target = $region40
      $region39: #{rdb_conv_forward.1} parent=35 // pred_region
        %s2462 = smul.u32 8, %s20
      $region40: #{rdb_conv_forward.1} parent=35 // pred_fallthru
        _
    $region36: #{rdb_conv_forward.1} parent=5 // pred_fallthru
      _
    %p2463 = scmp.le.s32.totalorder 2, %s10
    // Predicated region
    $region41: #{rdb_conv_forward.1} parent=5 // pred_check
      %p2464 = pneg %p2463
    $region42: #{rdb_conv_forward.1} parent=5 // pred_check_branch
      %2466 = sbr.rel (%p2464) target = $region44
    $region43: #{rdb_conv_forward.1} parent=5 // pred_region
      %s2467 = ssub.s32 %s10, 2
      // Predicated region
      $region45: #{rdb_conv_forward.1} parent=43 // pred_check
        %p2468 = pneg %p151
      $region46: #{rdb_conv_forward.1} parent=43 // pred_check_branch
        %2470 = sbr.rel (%p2468) target = $region48
      $region47: #{rdb_conv_forward.1} parent=43 // pred_region
        %s2471 = smul.u32 8, %s22
        %p2472 = scmp.lt.s32.totalorder %s21, 1
        %s2473 = scalar_select %p2472, %s21, 1
        %p2474 = scmp.lt.s32.totalorder %s2471, 15
        %s2475 = scalar_select %p2474, %s2471, 15
        %s2476 = smul.addr %s2475, 2
        %s2477 = smul.addr %s2473, 32
        %s2478 = sadd.s32 %s2476, %s2477
        %s2479 = smul.addr %s2478, 8
        %s2480 = scalar_lea.vmem %s4, %s2479
      $region48: #{rdb_conv_forward.1} parent=43 // pred_fallthru
        _
    $region44: #{rdb_conv_forward.1} parent=5 // pred_fallthru
      _
  $region6: #{rdb_conv_forward.1} parent=0 // loop_footer
    %s14 = sadd.s32 1, %s10
  $region7: #{rdb_conv_forward.1} parent=0 // loop_footer_branch
    %9 = sbr.rel target = $region3
  $region8: #{rdb_conv_forward.1} parent=0 // loop_exit
    _

</llo_original>
